<compile_context>
chip_gen: v6e
topology: v6e:2x2x1
jax: 0.10.0
libtpu: 0.0.40
codegen_flags: <defaults>
</compile_context>

<pallas_src>
import math

import jax
import jax.numpy as jnp
from jax import lax
from jax.experimental import pallas as pl
from jax.experimental.pallas import tpu as pltpu


def _round_up(x, m):
    return ((x + m - 1) // m) * m


def _layernorm(x, g, b, eps=1e-8):
    mu = jnp.mean(x, axis=-1, keepdims=True)
    var = jnp.mean(jnp.square(x - mu), axis=-1, keepdims=True)
    return (x - mu) * lax.rsqrt(var + eps) * g + b


def _chip_info():
    """Returns (vmem_capacity_bytes, dual_tensorcore) with safe fallbacks."""
    kind = ""
    try:
        kind = jax.devices()[0].device_kind.lower()
    except Exception:
        pass
    dual_core = "7" in kind                       # v7x: 2 TensorCores / chip
    vmem_cap = 64 * 1024 * 1024 if dual_core else 128 * 1024 * 1024
    try:
        info = pltpu.get_tpu_info()
        vmem_cap = int(getattr(info, "vmem_capacity_bytes", vmem_cap))
    except Exception:
        pass
    return vmem_cap, dual_core


def _make_kernel(num_blocks, d_true, tb, sp, dp):
    inv_d = 1.0 / float(d_true)
    rows = tb * sp

    def kernel(seqs_ref, mask_ref, pose_ref, nege_ref,
               ln1g_ref, ln1b_ref,
               wq_ref, wkv_ref, bq_ref, bkv_ref,
               wo_ref, bo_ref,
               ln2g_ref, ln2b_ref,
               w1_ref, b1_ref, w2_ref, b2_ref,
               lfg_ref, lfb_ref,
               pos_out_ref, neg_out_ref):

        def layernorm(x, g, b):
            # padded lanes of x are always zero -> sum * inv_d is the true
            # mean and E[x^2]-mu^2 the true variance; padded gamma/beta are
            # zero so padded output lanes stay zero (no lane mask needed).
            mu = jnp.sum(x, axis=-1, keepdims=True) * inv_d
            ex2 = jnp.sum(x * x, axis=-1, keepdims=True) * inv_d
            var = jnp.maximum(ex2 - mu * mu, 0.0)
            return (x - mu) * lax.rsqrt(var + 1e-8) * g + b

        x = seqs_ref[...].astype(jnp.float32).reshape(rows, dp)   # (TB*Sp, Dp)
        m = mask_ref[...].reshape(rows, 1)                        # (TB*Sp, 1)
        x = x * m

        row_i = lax.broadcasted_iota(jnp.int32, (sp, sp), 0)
        col_i = lax.broadcasted_iota(jnp.int32, (sp, sp), 1)
        causal = (col_i <= row_i)[None, :, :]                     # (1, Sp, Sp)

        for blk in range(num_blocks):
            q_in = layernorm(x, ln1g_ref[pl.ds(blk, 1), :],
                             ln1b_ref[pl.ds(blk, 1), :])

            q_bf = q_in.astype(jnp.bfloat16)
            x_bf = x.astype(jnp.bfloat16)
            # 1/sqrt(D) is folded into wq/bq host-side.
            q = (jnp.dot(q_bf, wq_ref[blk], preferred_element_type=jnp.float32)
                 + bq_ref[pl.ds(blk, 1), :])
            # fused K|V projection: a single N=2*Dp matmul.
            kv = (jnp.dot(x_bf, wkv_ref[blk], preferred_element_type=jnp.float32)
                  + bkv_ref[pl.ds(blk, 1), :])
            k = kv[:, :dp]
            v = kv[:, dp:]

            q3 = q.reshape(tb, sp, dp).astype(jnp.bfloat16)
            k3 = k.reshape(tb, sp, dp).astype(jnp.bfloat16)
            v3 = v.reshape(tb, sp, dp).astype(jnp.bfloat16)

            scores = jnp.einsum("bqd,bkd->bqk", q3, k3,
                                preferred_element_type=jnp.float32)
            scores = jnp.where(causal, scores, -1e30)    # causal mask (f32)
            smax = jnp.max(scores, axis=-1, keepdims=True)
            e = jnp.exp(scores - smax)
            denom = jnp.sum(e, axis=-1, keepdims=True)
            p = e * pl.reciprocal(denom, approx=True)    # attn dropout = id

            attn = jnp.einsum("bqk,bkd->bqd", p.astype(jnp.bfloat16), v3,
                              preferred_element_type=jnp.float32)
            attn2 = attn.reshape(rows, dp).astype(jnp.bfloat16)
            mha = (jnp.dot(attn2, wo_ref[blk], preferred_element_type=jnp.float32)
                   + bo_ref[pl.ds(blk, 1), :])
            x = q_in + mha                               # residual from LN'd Q

            # forward layernorm + PointWiseFeedForward (Conv1d k=1 == dense)
            x = layernorm(x, ln2g_ref[pl.ds(blk, 1), :],
                          ln2b_ref[pl.ds(blk, 1), :])
            x_bf = x.astype(jnp.bfloat16)
            h = jnp.maximum(
                jnp.dot(x_bf, w1_ref[blk], preferred_element_type=jnp.float32)
                + b1_ref[pl.ds(blk, 1), :], 0.0)
            ff = (jnp.dot(h.astype(jnp.bfloat16), w2_ref[blk],
                          preferred_element_type=jnp.float32)
                  + b2_ref[pl.ds(blk, 1), :])
            x = ff + x
            x = x * m                                    # re-apply timeline mask

        feats = layernorm(x, lfg_ref[pl.ds(0, 1), :], lfb_ref[pl.ds(0, 1), :])
        feats3 = feats.reshape(tb, sp, dp)
        pos_out_ref[0] = jnp.sum(feats3 * pose_ref[...].astype(jnp.float32), axis=-1)
        neg_out_ref[0] = jnp.sum(feats3 * nege_ref[...].astype(jnp.float32), axis=-1)

    return kernel


def sasrec_forward_pallas(params, log_seqs, pos_seqs, neg_seqs):
    item_emb = params["item_emb"]
    pos_emb = params["pos_emb"]
    B, S = log_seqs.shape
    D = item_emb.shape[1]
    num_blocks = params["wq"].shape[0]

    # ---- pad hidden dim to a lane multiple ----
    Dp = _round_up(D, 128)
    pad_d = Dp - D

    # ---- pad seq length: always a multiple of 8 (copy-free reshapes), up to a
    # multiple of 128 when the inflation stays <= ~4/3x (lane-dense scores and
    # unmasked output stores). Padded key cols are removed by the causal mask.
    Sp128 = _round_up(S, 128)
    Sp = Sp128 if 3 * Sp128 <= 4 * S else _round_up(S, 8)
    pad_s = Sp - S

    item_emb_p = jnp.pad(item_emb, ((0, 0), (0, pad_d)))
    pos_emb_p = jnp.pad(pos_emb, ((0, 0), (0, pad_d)))

    # embedding glue (gathers) in plain JAX
    # TODO(synk): fuse these gathers into the kernel (scalar-prefetched ids +
    # manual HBM row DMA) to remove one full HBM write+read of the activations.
    seqs = item_emb_p[log_seqs] * (D ** 0.5) + pos_emb_p[jnp.arange(S)][None]
    mask = (log_seqs != 0).astype(jnp.float32)[..., None]      # (B, S, 1)
    pose = item_emb_p[pos_seqs]
    nege = item_emb_p[neg_seqs]
    if pad_s:
        seqs = jnp.pad(seqs, ((0, 0), (0, pad_s), (0, 0)))
        mask = jnp.pad(mask, ((0, 0), (0, pad_s), (0, 0)))
        pose = jnp.pad(pose, ((0, 0), (0, pad_s), (0, 0)))
        nege = jnp.pad(nege, ((0, 0), (0, pad_s), (0, 0)))

    # ---- weights: pad to Dp, pre-transpose to (in, out), fold q-scale, bf16 ----
    def mat_t(name, scale=None):
        w = jnp.swapaxes(params[name], -1, -2)                 # (nb, in, out)
        if scale is not None:
            w = w * scale
        w = jnp.pad(w, ((0, 0), (0, pad_d), (0, pad_d)))
        return w.astype(jnp.bfloat16)

    def vec(name, scale=None):
        v = params[name]
        if scale is not None:
            v = v * scale
        return jnp.pad(v, ((0, 0), (0, pad_d)))                # f32, zeros in pad

    qscale = 1.0 / math.sqrt(float(D))
    wkv = jnp.concatenate([mat_t("wk"), mat_t("wv")], axis=-1)   # (nb, Dp, 2Dp)
    bkv = jnp.concatenate([vec("bk"), vec("bv")], axis=-1)       # (nb, 2Dp)
    weights = [
        vec("ln1g"), vec("ln1b"),
        mat_t("wq", qscale), wkv, vec("bq", qscale), bkv,
        mat_t("wo"), vec("bo"),
        vec("ln2g"), vec("ln2b"),
        mat_t("w1"), vec("b1"), mat_t("w2"), vec("b2"),
        vec("lfg"), vec("lfb"),
    ]
    weight_bytes = int(sum(int(w.size) * w.dtype.itemsize for w in weights))

    # ---- per-chip VMEM budget & batch tile (TB sequences per grid step) ----
    vmem_cap, dual_core = _chip_info()
    vmem_limit = min((vmem_cap * 3) // 4, 112 * 1024 * 1024)   # ~48 MiB v7x, ~96 MiB v5e/v6e
    vmem_limit = max(vmem_limit, 32 * 1024 * 1024)

    act_bytes = 2                                              # bf16 activation streams

    def vmem_estimate(tb):
        rows = tb * Sp
        live_f32 = 10 * rows * Dp * 4                          # residual + LN/proj temps
        softmax = 3 * tb * Sp * Sp * 4                         # scores / exp / p
        io = 2 * (3 * rows * Dp * act_bytes + rows * 4)        # dbl-buffered seqs/pose/nege + mask
        outs = 2 * 2 * rows * 4
        return live_f32 + softmax + io + outs + 2 * weight_bytes

    target_rows = 2048 if vmem_limit >= (80 << 20) else 1024
    tb = max(1, min(B, max(1, target_rows // Sp)))
    while tb > 1 and vmem_estimate(tb) > (vmem_limit * 4) // 5:
        tb = max(1, tb // 2)
    if dual_core and B >= 2 and -(-B // tb) < 2:
        tb = -(-B // 2)                                        # keep both v7x TCs busy

    Bp = (-(-B // tb)) * tb
    if Bp != B:
        pb = Bp - B
        seqs = jnp.pad(seqs, ((0, pb), (0, 0), (0, 0)))
        mask = jnp.pad(mask, ((0, pb), (0, 0), (0, 0)))
        pose = jnp.pad(pose, ((0, pb), (0, 0), (0, 0)))
        nege = jnp.pad(nege, ((0, pb), (0, 0), (0, 0)))
    ntiles = Bp // tb

    # bf16 activation streams (halves HBM read traffic); stats stay f32 in-kernel
    seqs = seqs.astype(jnp.bfloat16)
    pose = pose.astype(jnp.bfloat16)
    nege = nege.astype(jnp.bfloat16)

    seq_spec = pl.BlockSpec((tb, Sp, Dp), lambda b: (b, 0, 0))
    mask_spec = pl.BlockSpec((tb, Sp, 1), lambda b: (b, 0, 0))

    def full_spec(arr):
        nd = arr.ndim
        return pl.BlockSpec(arr.shape, lambda b, nd=nd: (0,) * nd)

    in_specs = ([seq_spec, mask_spec, seq_spec, seq_spec]
                + [full_spec(w) for w in weights])
    out_spec = pl.BlockSpec((1, tb, Sp), lambda b: (b, 0, 0))
    out_shape = (jax.ShapeDtypeStruct((ntiles, tb, Sp), jnp.float32),
                 jax.ShapeDtypeStruct((ntiles, tb, Sp), jnp.float32))

    kernel = _make_kernel(num_blocks, D, tb, Sp, Dp)

    fn = pl.pallas_call(
        kernel,
        out_shape=out_shape,
        grid_spec=pltpu.PrefetchScalarGridSpec(
            num_scalar_prefetch=0,
            grid=(ntiles,),
            in_specs=in_specs,
            out_specs=[out_spec, out_spec]),
        compiler_params=pltpu.CompilerParams(
            dimension_semantics=("parallel",),
            vmem_limit_bytes=int(vmem_limit)),
    )
    pos_l, neg_l = fn(seqs, mask, pose, nege, *weights)
    pos_l = pos_l.reshape(Bp, Sp)[:B, :S]
    neg_l = neg_l.reshape(Bp, Sp)[:B, :S]
    return pos_l, neg_l


def sasrec_forward_ref(params, log_seqs, pos_seqs, neg_seqs):
    """Pure-JAX reference (eval mode) mirroring the kernel numerics:
    bf16 activation streams / MXU operands with f32 accumulation;
    layernorm/softmax statistics and residuals in f32."""
    item_emb = params["item_emb"]
    pos_emb = params["pos_emb"]
    B, S = log_seqs.shape
    D = item_emb.shape[1]
    bf = jnp.bfloat16

    def mm(a, w):   # a @ w.T with bf16 operands, f32 accumulation
        return jnp.dot(a.astype(bf), w.T.astype(bf),
                       preferred_element_type=jnp.float32)

    x = item_emb[log_seqs] * (D ** 0.5) + pos_emb[jnp.arange(S)][None]
    x = x.astype(bf).astype(jnp.float32)               # bf16 activation stream
    m = (log_seqs != 0).astype(jnp.float32)[..., None]
    x = x * m
    causal = jnp.tril(jnp.ones((S, S), dtype=bool))
    nb = params["wq"].shape[0]
    for blk in range(nb):
        q_in = _layernorm(x, params["ln1g"][blk], params["ln1b"][blk])
        q = (mm(q_in, params["wq"][blk]) + params["bq"][blk]) / jnp.sqrt(jnp.float32(D))
        k = mm(x, params["wk"][blk]) + params["bk"][blk]
        v = mm(x, params["wv"][blk]) + params["bv"][blk]
        scores = jnp.einsum("bqd,bkd->bqk", q.astype(bf), k.astype(bf),
                            preferred_element_type=jnp.float32)
        scores = jnp.where(causal[None], scores, -1e30)
        p = jax.nn.softmax(scores, axis=-1)
        attn = jnp.einsum("bqk,bkd->bqd", p.astype(bf), v.astype(bf),
                          preferred_element_type=jnp.float32)
        mha = mm(attn, params["wo"][blk]) + params["bo"][blk]
        x = q_in + mha
        x = _layernorm(x, params["ln2g"][blk], params["ln2b"][blk])
        h = jnp.maximum(mm(x, params["w1"][blk]) + params["b1"][blk], 0.0)
        x = mm(h, params["w2"][blk]) + params["b2"][blk] + x
        x = x * m
    feats = _layernorm(x, params["lfg"][0], params["lfb"][0])
    pose = item_emb[pos_seqs].astype(bf).astype(jnp.float32)
    nege = item_emb[neg_seqs].astype(bf).astype(jnp.float32)
    pos_logits = jnp.sum(feats * pose, axis=-1)
    neg_logits = jnp.sum(feats * nege, axis=-1)
    return pos_logits, neg_logits


def init_params(key, item_num, max_len, hidden, num_blocks):
    ks = jax.random.split(key, 32)
    it = iter(ks)

    def nrm(shape, scale=0.05):
        return (scale * jax.random.normal(next(it), shape)).astype(jnp.float32)

    item_emb = nrm((item_num + 1, hidden))
    item_emb = item_emb.at[0].set(0.0)          # padding_idx=0
    params = {
        "item_emb": item_emb,
        "pos_emb": nrm((max_len, hidden)),
        "ln1g": jnp.ones((num_blocks, hidden), jnp.float32),
        "ln1b": jnp.zeros((num_blocks, hidden), jnp.float32),
        "wq": nrm((num_blocks, hidden, hidden)),
        "wk": nrm((num_blocks, hidden, hidden)),
        "wv": nrm((num_blocks, hidden, hidden)),
        "bq": nrm((num_blocks, hidden), 0.01),
        "bk": nrm((num_blocks, hidden), 0.01),
        "bv": nrm((num_blocks, hidden), 0.01),
        "wo": nrm((num_blocks, hidden, hidden)),
        "bo": nrm((num_blocks, hidden), 0.01),
        "ln2g": jnp.ones((num_blocks, hidden), jnp.float32),
        "ln2b": jnp.zeros((num_blocks, hidden), jnp.float32),
        "w1": nrm((num_blocks, hidden, hidden)),   # Conv1d(k=1) weight, (out, in)
        "b1": nrm((num_blocks, hidden), 0.01),
        "w2": nrm((num_blocks, hidden, hidden)),
        "b2": nrm((num_blocks, hidden), 0.01),
        "lfg": jnp.ones((1, hidden), jnp.float32),
        "lfb": jnp.zeros((1, hidden), jnp.float32),
    }
    return params


if __name__ == "__main__":
    B, S, D = 2, 8, 32
    item_num, num_blocks = 100, 2

    key = jax.random.PRNGKey(0)
    k_par, k_seq, k_pos, k_neg = jax.random.split(key, 4)
    params = init_params(k_par, item_num, S, D, num_blocks)

    log_seqs = jax.random.randint(k_seq, (B, S), 0, item_num + 1)   # 0 = padding
    log_seqs = log_seqs.at[0, :3].set(0)                            # force some padding
    pos_seqs = jax.random.randint(k_pos, (B, S), 1, item_num + 1)
    neg_seqs = jax.random.randint(k_neg, (B, S), 1, item_num + 1)

    pos_logits, neg_logits = sasrec_forward_pallas(params, log_seqs, pos_seqs, neg_seqs)
    jax.block_until_ready((pos_logits, neg_logits))

    ref_pos, ref_neg = sasrec_forward_ref(params, log_seqs, pos_seqs, neg_seqs)
    assert pos_logits.shape == (B, S) and neg_logits.shape == (B, S)
    assert jnp.allclose(pos_logits, ref_pos, rtol=5e-3, atol=5e-3)
    assert jnp.allclose(neg_logits, ref_neg, rtol=5e-3, atol=5e-3)

    print("KERNEL_OK")
</pallas_src>

<mosaic_0001>
module attributes {stable_mosaic.version = 11 : i64} {
  func.func @kernel(%arg0: i32, %arg1: memref<2x8x128xbf16, #tpu.memory_space<vmem>>, %arg2: memref<2x8x1xf32, #tpu.memory_space<vmem>>, %arg3: memref<2x8x128xbf16, #tpu.memory_space<vmem>>, %arg4: memref<2x8x128xbf16, #tpu.memory_space<vmem>>, %arg5: memref<2x128xf32, #tpu.memory_space<vmem>>, %arg6: memref<2x128xf32, #tpu.memory_space<vmem>>, %arg7: memref<2x128x128xbf16, #tpu.memory_space<vmem>>, %arg8: memref<2x128x256xbf16, #tpu.memory_space<vmem>>, %arg9: memref<2x128xf32, #tpu.memory_space<vmem>>, %arg10: memref<2x256xf32, #tpu.memory_space<vmem>>, %arg11: memref<2x128x128xbf16, #tpu.memory_space<vmem>>, %arg12: memref<2x128xf32, #tpu.memory_space<vmem>>, %arg13: memref<2x128xf32, #tpu.memory_space<vmem>>, %arg14: memref<2x128xf32, #tpu.memory_space<vmem>>, %arg15: memref<2x128x128xbf16, #tpu.memory_space<vmem>>, %arg16: memref<2x128xf32, #tpu.memory_space<vmem>>, %arg17: memref<2x128x128xbf16, #tpu.memory_space<vmem>>, %arg18: memref<2x128xf32, #tpu.memory_space<vmem>>, %arg19: memref<1x128xf32, #tpu.memory_space<vmem>>, %arg20: memref<1x128xf32, #tpu.memory_space<vmem>>, %arg21: memref<1x2x8xf32, #tpu.memory_space<vmem>>, %arg22: memref<1x2x8xf32, #tpu.memory_space<vmem>>) attributes {dimension_semantics = [#tpu.dimension_semantics<parallel>], iteration_bounds = array<i64: 1>, scalar_prefetch = 0 : i64, scratch_operands = 0 : i64, tpu.core_type = #tpu.core_type<tc>, window_params = [{transform_indices = @transform_0, window_bounds = array<i64: 2, 8, 128>}, {transform_indices = @transform_1, window_bounds = array<i64: 2, 8, 1>}, {transform_indices = @transform_2, window_bounds = array<i64: 2, 8, 128>}, {transform_indices = @transform_3, window_bounds = array<i64: 2, 8, 128>}, {pipeline_mode = #tpu.pipeline_mode<synchronous>, transform_indices = @transform_4, window_bounds = array<i64: 2, 128>}, {pipeline_mode = #tpu.pipeline_mode<synchronous>, transform_indices = @transform_5, window_bounds = array<i64: 2, 128>}, {pipeline_mode = #tpu.pipeline_mode<synchronous>, transform_indices = @transform_6, window_bounds = array<i64: 2, 128, 128>}, {pipeline_mode = #tpu.pipeline_mode<synchronous>, transform_indices = @transform_7, window_bounds = array<i64: 2, 128, 256>}, {pipeline_mode = #tpu.pipeline_mode<synchronous>, transform_indices = @transform_8, window_bounds = array<i64: 2, 128>}, {pipeline_mode = #tpu.pipeline_mode<synchronous>, transform_indices = @transform_9, window_bounds = array<i64: 2, 256>}, {pipeline_mode = #tpu.pipeline_mode<synchronous>, transform_indices = @transform_10, window_bounds = array<i64: 2, 128, 128>}, {pipeline_mode = #tpu.pipeline_mode<synchronous>, transform_indices = @transform_11, window_bounds = array<i64: 2, 128>}, {pipeline_mode = #tpu.pipeline_mode<synchronous>, transform_indices = @transform_12, window_bounds = array<i64: 2, 128>}, {pipeline_mode = #tpu.pipeline_mode<synchronous>, transform_indices = @transform_13, window_bounds = array<i64: 2, 128>}, {pipeline_mode = #tpu.pipeline_mode<synchronous>, transform_indices = @transform_14, window_bounds = array<i64: 2, 128, 128>}, {pipeline_mode = #tpu.pipeline_mode<synchronous>, transform_indices = @transform_15, window_bounds = array<i64: 2, 128>}, {pipeline_mode = #tpu.pipeline_mode<synchronous>, transform_indices = @transform_16, window_bounds = array<i64: 2, 128, 128>}, {pipeline_mode = #tpu.pipeline_mode<synchronous>, transform_indices = @transform_17, window_bounds = array<i64: 2, 128>}, {pipeline_mode = #tpu.pipeline_mode<synchronous>, transform_indices = @transform_18, window_bounds = array<i64: 1, 128>}, {pipeline_mode = #tpu.pipeline_mode<synchronous>, transform_indices = @transform_19, window_bounds = array<i64: 1, 128>}, {transform_indices = @transform_20, window_bounds = array<i64: 1, 2, 8>}, {transform_indices = @transform_21, window_bounds = array<i64: 1, 2, 8>}]} {
    %c0 = arith.constant 0 : index
    %c0_0 = arith.constant 0 : index
    %c0_1 = arith.constant 0 : index
    %0 = vector.load %arg1[%c0, %c0_0, %c0_1] : memref<2x8x128xbf16, #tpu.memory_space<vmem>>, vector<2x8x128xbf16>
    %1 = arith.extf %0 : vector<2x8x128xbf16> to vector<2x8x128xf32>
    %2 = vector.shape_cast %1 : vector<2x8x128xf32> to vector<16x128xf32>
    %c0_2 = arith.constant 0 : index
    %c0_3 = arith.constant 0 : index
    %c0_4 = arith.constant 0 : index
    %3 = vector.load %arg2[%c0_2, %c0_3, %c0_4] : memref<2x8x1xf32, #tpu.memory_space<vmem>>, vector<2x8x1xf32>
    %4 = vector.shape_cast %3 : vector<2x8x1xf32> to vector<16x1xf32>
    %5 = vector.broadcast %4 : vector<16x1xf32> to vector<16x128xf32>
    %6 = arith.mulf %2, %5 : vector<16x128xf32>
    %7 = tpu.iota {dimensions = array<i32: 0>} : vector<8x8xi32>
    %8 = tpu.iota {dimensions = array<i32: 1>} : vector<8x8xi32>
    %9 = arith.cmpi sle, %8, %7 : vector<8x8xi32>
    %10 = vector.shape_cast %9 : vector<8x8xi1> to vector<1x8x8xi1>
    %c0_5 = arith.constant 0 : index
    %c0_6 = arith.constant 0 : index
    %11 = vector.load %arg5[%c0_5, %c0_6] : memref<2x128xf32, #tpu.memory_space<vmem>>, vector<1x128xf32>
    %c0_7 = arith.constant 0 : index
    %c0_8 = arith.constant 0 : index
    %12 = vector.load %arg6[%c0_7, %c0_8] : memref<2x128xf32, #tpu.memory_space<vmem>>, vector<1x128xf32>
    %cst = arith.constant dense<0.000000e+00> : vector<16xf32>
    %13 = vector.multi_reduction <add>, %6, %cst [1] : vector<16x128xf32> to vector<16xf32>
    %14 = vector.shape_cast %13 : vector<16xf32> to vector<16x1xf32>
    %cst_9 = arith.constant 3.125000e-02 : f32
    %15 = vector.broadcast %cst_9 : f32 to vector<16x1xf32>
    %16 = arith.mulf %14, %15 : vector<16x1xf32>
    %17 = arith.mulf %6, %6 : vector<16x128xf32>
    %cst_10 = arith.constant dense<0.000000e+00> : vector<16xf32>
    %18 = vector.multi_reduction <add>, %17, %cst_10 [1] : vector<16x128xf32> to vector<16xf32>
    %19 = vector.shape_cast %18 : vector<16xf32> to vector<16x1xf32>
    %cst_11 = arith.constant 3.125000e-02 : f32
    %20 = vector.broadcast %cst_11 : f32 to vector<16x1xf32>
    %21 = arith.mulf %19, %20 : vector<16x1xf32>
    %22 = arith.mulf %16, %16 : vector<16x1xf32>
    %23 = arith.subf %21, %22 : vector<16x1xf32>
    %cst_12 = arith.constant 0.000000e+00 : f32
    %24 = vector.broadcast %cst_12 : f32 to vector<16x1xf32>
    %25 = arith.maximumf %23, %24 : vector<16x1xf32>
    %26 = vector.broadcast %16 : vector<16x1xf32> to vector<16x128xf32>
    %27 = arith.subf %6, %26 : vector<16x128xf32>
    %cst_13 = arith.constant 9.99999993E-9 : f32
    %28 = vector.broadcast %cst_13 : f32 to vector<16x1xf32>
    %29 = arith.addf %25, %28 : vector<16x1xf32>
    %30 = math.rsqrt %29 : vector<16x1xf32>
    %31 = vector.broadcast %30 : vector<16x1xf32> to vector<16x128xf32>
    %32 = arith.mulf %27, %31 : vector<16x128xf32>
    %33 = vector.broadcast %11 : vector<1x128xf32> to vector<16x128xf32>
    %34 = arith.mulf %32, %33 : vector<16x128xf32>
    %35 = vector.broadcast %12 : vector<1x128xf32> to vector<16x128xf32>
    %36 = arith.addf %34, %35 : vector<16x128xf32>
    %37 = arith.truncf %36 : vector<16x128xf32> to vector<16x128xbf16>
    %38 = arith.truncf %6 : vector<16x128xf32> to vector<16x128xbf16>
    %c0_14 = arith.constant 0 : index
    %c0_15 = arith.constant 0 : index
    %c0_16 = arith.constant 0 : index
    %39 = vector.load %arg7[%c0_14, %c0_15, %c0_16] : memref<2x128x128xbf16, #tpu.memory_space<vmem>>, vector<1x128x128xbf16>
    %40 = vector.shape_cast %39 : vector<1x128x128xbf16> to vector<128x128xbf16>
    %cst_17 = arith.constant dense<0.000000e+00> : vector<16x128xf32>
    %41 = tpu.matmul %37, %40, %cst_17 {dimension_numbers = #tpu.dot_dimension_numbers<[1], [0], [0], [1], [0, 0, 1, 1], [], []>} : vector<16x128xbf16>, vector<128x128xbf16>, vector<16x128xf32> -> vector<16x128xf32>
    %c0_18 = arith.constant 0 : index
    %c0_19 = arith.constant 0 : index
    %42 = vector.load %arg9[%c0_18, %c0_19] : memref<2x128xf32, #tpu.memory_space<vmem>>, vector<1x128xf32>
    %43 = vector.broadcast %42 : vector<1x128xf32> to vector<16x128xf32>
    %44 = arith.addf %41, %43 : vector<16x128xf32>
    %c0_20 = arith.constant 0 : index
    %c0_21 = arith.constant 0 : index
    %c0_22 = arith.constant 0 : index
    %45 = vector.load %arg8[%c0_20, %c0_21, %c0_22] : memref<2x128x256xbf16, #tpu.memory_space<vmem>>, vector<1x128x256xbf16>
    %46 = vector.shape_cast %45 : vector<1x128x256xbf16> to vector<128x256xbf16>
    %cst_23 = arith.constant dense<0.000000e+00> : vector<16x256xf32>
    %47 = tpu.matmul %38, %46, %cst_23 {dimension_numbers = #tpu.dot_dimension_numbers<[1], [0], [0], [1], [0, 0, 1, 1], [], []>} : vector<16x128xbf16>, vector<128x256xbf16>, vector<16x256xf32> -> vector<16x256xf32>
    %c0_24 = arith.constant 0 : index
    %c0_25 = arith.constant 0 : index
    %48 = vector.load %arg10[%c0_24, %c0_25] : memref<2x256xf32, #tpu.memory_space<vmem>>, vector<1x256xf32>
    %49 = vector.broadcast %48 : vector<1x256xf32> to vector<16x256xf32>
    %50 = arith.addf %47, %49 : vector<16x256xf32>
    %51 = vector.extract_strided_slice %50 {offsets = [0, 0], sizes = [16, 128], strides = [1, 1]} : vector<16x256xf32> to vector<16x128xf32>
    %52 = vector.extract_strided_slice %50 {offsets = [0, 128], sizes = [16, 128], strides = [1, 1]} : vector<16x256xf32> to vector<16x128xf32>
    %53 = vector.shape_cast %44 : vector<16x128xf32> to vector<2x8x128xf32>
    %54 = arith.truncf %53 : vector<2x8x128xf32> to vector<2x8x128xbf16>
    %55 = vector.shape_cast %51 : vector<16x128xf32> to vector<2x8x128xf32>
    %56 = arith.truncf %55 : vector<2x8x128xf32> to vector<2x8x128xbf16>
    %57 = vector.shape_cast %52 : vector<16x128xf32> to vector<2x8x128xf32>
    %58 = arith.truncf %57 : vector<2x8x128xf32> to vector<2x8x128xbf16>
    "tpu.trace_start"() <{level = 10 : i32, message = "bqd,bkd->bqk"}> : () -> ()
    %cst_26 = arith.constant dense<0.000000e+00> : vector<2x8x8xf32>
    %59 = tpu.matmul %54, %56, %cst_26 {dimension_numbers = #tpu.dot_dimension_numbers<[2], [2], [1], [1], [0, 0, 0, 1, 1, 1], [0], [0]>} : vector<2x8x128xbf16>, vector<2x8x128xbf16>, vector<2x8x8xf32> -> vector<2x8x8xf32>
    %cst_27 = arith.constant -1.000000e+30 : f32
    "tpu.trace_stop"() : () -> ()
    %60 = vector.shape_cast %10 : vector<1x8x8xi1> to vector<1x8x8xi1>
    %61 = vector.broadcast %60 : vector<1x8x8xi1> to vector<2x8x8xi1>
    %62 = vector.broadcast %cst_27 : f32 to vector<2x8x8xf32>
    %63 = arith.select %61, %59, %62 : vector<2x8x8xi1>, vector<2x8x8xf32>
    %cst_28 = arith.constant dense<0xFF800000> : vector<2x8xf32>
    %64 = vector.multi_reduction <maximumf>, %63, %cst_28 [2] : vector<2x8x8xf32> to vector<2x8xf32>
    %65 = vector.shape_cast %64 : vector<2x8xf32> to vector<2x8x1xf32>
    %66 = vector.broadcast %65 : vector<2x8x1xf32> to vector<2x8x8xf32>
    %67 = arith.subf %63, %66 : vector<2x8x8xf32>
    %68 = math.exp %67 : vector<2x8x8xf32>
    %cst_29 = arith.constant dense<0.000000e+00> : vector<2x8xf32>
    %69 = vector.multi_reduction <add>, %68, %cst_29 [2] : vector<2x8x8xf32> to vector<2x8xf32>
    %70 = vector.shape_cast %69 : vector<2x8xf32> to vector<2x8x1xf32>
    %71 = tpu.reciprocal %70 {approx = true} : vector<2x8x1xf32> -> vector<2x8x1xf32>
    %72 = vector.broadcast %71 : vector<2x8x1xf32> to vector<2x8x8xf32>
    %73 = arith.mulf %68, %72 : vector<2x8x8xf32>
    %74 = arith.truncf %73 : vector<2x8x8xf32> to vector<2x8x8xbf16>
    "tpu.trace_start"() <{level = 10 : i32, message = "bqk,bkd->bqd"}> : () -> ()
    %cst_30 = arith.constant dense<0.000000e+00> : vector<2x8x128xf32>
    %75 = tpu.matmul %74, %58, %cst_30 {dimension_numbers = #tpu.dot_dimension_numbers<[2], [1], [1], [2], [0, 0, 0, 1, 1, 2], [0], [0]>} : vector<2x8x8xbf16>, vector<2x8x128xbf16>, vector<2x8x128xf32> -> vector<2x8x128xf32>
    "tpu.trace_stop"() : () -> ()
    %76 = vector.shape_cast %75 : vector<2x8x128xf32> to vector<16x128xf32>
    %77 = arith.truncf %76 : vector<16x128xf32> to vector<16x128xbf16>
    %c0_31 = arith.constant 0 : index
    %c0_32 = arith.constant 0 : index
    %c0_33 = arith.constant 0 : index
    %78 = vector.load %arg11[%c0_31, %c0_32, %c0_33] : memref<2x128x128xbf16, #tpu.memory_space<vmem>>, vector<1x128x128xbf16>
    %79 = vector.shape_cast %78 : vector<1x128x128xbf16> to vector<128x128xbf16>
    %cst_34 = arith.constant dense<0.000000e+00> : vector<16x128xf32>
    %80 = tpu.matmul %77, %79, %cst_34 {dimension_numbers = #tpu.dot_dimension_numbers<[1], [0], [0], [1], [0, 0, 1, 1], [], []>} : vector<16x128xbf16>, vector<128x128xbf16>, vector<16x128xf32> -> vector<16x128xf32>
    %c0_35 = arith.constant 0 : index
    %c0_36 = arith.constant 0 : index
    %81 = vector.load %arg12[%c0_35, %c0_36] : memref<2x128xf32, #tpu.memory_space<vmem>>, vector<1x128xf32>
    %82 = vector.broadcast %81 : vector<1x128xf32> to vector<16x128xf32>
    %83 = arith.addf %80, %82 : vector<16x128xf32>
    %84 = arith.addf %36, %83 : vector<16x128xf32>
    %c0_37 = arith.constant 0 : index
    %c0_38 = arith.constant 0 : index
    %85 = vector.load %arg13[%c0_37, %c0_38] : memref<2x128xf32, #tpu.memory_space<vmem>>, vector<1x128xf32>
    %c0_39 = arith.constant 0 : index
    %c0_40 = arith.constant 0 : index
    %86 = vector.load %arg14[%c0_39, %c0_40] : memref<2x128xf32, #tpu.memory_space<vmem>>, vector<1x128xf32>
    %cst_41 = arith.constant dense<0.000000e+00> : vector<16xf32>
    %87 = vector.multi_reduction <add>, %84, %cst_41 [1] : vector<16x128xf32> to vector<16xf32>
    %88 = vector.shape_cast %87 : vector<16xf32> to vector<16x1xf32>
    %cst_42 = arith.constant 3.125000e-02 : f32
    %89 = vector.broadcast %cst_42 : f32 to vector<16x1xf32>
    %90 = arith.mulf %88, %89 : vector<16x1xf32>
    %91 = arith.mulf %84, %84 : vector<16x128xf32>
    %cst_43 = arith.constant dense<0.000000e+00> : vector<16xf32>
    %92 = vector.multi_reduction <add>, %91, %cst_43 [1] : vector<16x128xf32> to vector<16xf32>
    %93 = vector.shape_cast %92 : vector<16xf32> to vector<16x1xf32>
    %cst_44 = arith.constant 3.125000e-02 : f32
    %94 = vector.broadcast %cst_44 : f32 to vector<16x1xf32>
    %95 = arith.mulf %93, %94 : vector<16x1xf32>
    %96 = arith.mulf %90, %90 : vector<16x1xf32>
    %97 = arith.subf %95, %96 : vector<16x1xf32>
    %cst_45 = arith.constant 0.000000e+00 : f32
    %98 = vector.broadcast %cst_45 : f32 to vector<16x1xf32>
    %99 = arith.maximumf %97, %98 : vector<16x1xf32>
    %100 = vector.broadcast %90 : vector<16x1xf32> to vector<16x128xf32>
    %101 = arith.subf %84, %100 : vector<16x128xf32>
    %cst_46 = arith.constant 9.99999993E-9 : f32
    %102 = vector.broadcast %cst_46 : f32 to vector<16x1xf32>
    %103 = arith.addf %99, %102 : vector<16x1xf32>
    %104 = math.rsqrt %103 : vector<16x1xf32>
    %105 = vector.broadcast %104 : vector<16x1xf32> to vector<16x128xf32>
    %106 = arith.mulf %101, %105 : vector<16x128xf32>
    %107 = vector.broadcast %85 : vector<1x128xf32> to vector<16x128xf32>
    %108 = arith.mulf %106, %107 : vector<16x128xf32>
    %109 = vector.broadcast %86 : vector<1x128xf32> to vector<16x128xf32>
    %110 = arith.addf %108, %109 : vector<16x128xf32>
    %111 = arith.truncf %110 : vector<16x128xf32> to vector<16x128xbf16>
    %c0_47 = arith.constant 0 : index
    %c0_48 = arith.constant 0 : index
    %c0_49 = arith.constant 0 : index
    %112 = vector.load %arg15[%c0_47, %c0_48, %c0_49] : memref<2x128x128xbf16, #tpu.memory_space<vmem>>, vector<1x128x128xbf16>
    %113 = vector.shape_cast %112 : vector<1x128x128xbf16> to vector<128x128xbf16>
    %cst_50 = arith.constant dense<0.000000e+00> : vector<16x128xf32>
    %114 = tpu.matmul %111, %113, %cst_50 {dimension_numbers = #tpu.dot_dimension_numbers<[1], [0], [0], [1], [0, 0, 1, 1], [], []>} : vector<16x128xbf16>, vector<128x128xbf16>, vector<16x128xf32> -> vector<16x128xf32>
    %c0_51 = arith.constant 0 : index
    %c0_52 = arith.constant 0 : index
    %115 = vector.load %arg16[%c0_51, %c0_52] : memref<2x128xf32, #tpu.memory_space<vmem>>, vector<1x128xf32>
    %116 = vector.broadcast %115 : vector<1x128xf32> to vector<16x128xf32>
    %117 = arith.addf %114, %116 : vector<16x128xf32>
    %cst_53 = arith.constant 0.000000e+00 : f32
    %118 = vector.broadcast %cst_53 : f32 to vector<16x128xf32>
    %119 = arith.maximumf %117, %118 : vector<16x128xf32>
    %120 = arith.truncf %119 : vector<16x128xf32> to vector<16x128xbf16>
    %c0_54 = arith.constant 0 : index
    %c0_55 = arith.constant 0 : index
    %c0_56 = arith.constant 0 : index
    %121 = vector.load %arg17[%c0_54, %c0_55, %c0_56] : memref<2x128x128xbf16, #tpu.memory_space<vmem>>, vector<1x128x128xbf16>
    %122 = vector.shape_cast %121 : vector<1x128x128xbf16> to vector<128x128xbf16>
    %cst_57 = arith.constant dense<0.000000e+00> : vector<16x128xf32>
    %123 = tpu.matmul %120, %122, %cst_57 {dimension_numbers = #tpu.dot_dimension_numbers<[1], [0], [0], [1], [0, 0, 1, 1], [], []>} : vector<16x128xbf16>, vector<128x128xbf16>, vector<16x128xf32> -> vector<16x128xf32>
    %c0_58 = arith.constant 0 : index
    %c0_59 = arith.constant 0 : index
    %124 = vector.load %arg18[%c0_58, %c0_59] : memref<2x128xf32, #tpu.memory_space<vmem>>, vector<1x128xf32>
    %125 = vector.broadcast %124 : vector<1x128xf32> to vector<16x128xf32>
    %126 = arith.addf %123, %125 : vector<16x128xf32>
    %127 = arith.addf %126, %110 : vector<16x128xf32>
    %128 = vector.broadcast %4 : vector<16x1xf32> to vector<16x128xf32>
    %129 = arith.mulf %127, %128 : vector<16x128xf32>
    %c1 = arith.constant 1 : index
    %c0_60 = arith.constant 0 : index
    %130 = vector.load %arg5[%c1, %c0_60] : memref<2x128xf32, #tpu.memory_space<vmem>>, vector<1x128xf32>
    %c1_61 = arith.constant 1 : index
    %c0_62 = arith.constant 0 : index
    %131 = vector.load %arg6[%c1_61, %c0_62] : memref<2x128xf32, #tpu.memory_space<vmem>>, vector<1x128xf32>
    %cst_63 = arith.constant dense<0.000000e+00> : vector<16xf32>
    %132 = vector.multi_reduction <add>, %129, %cst_63 [1] : vector<16x128xf32> to vector<16xf32>
    %133 = vector.shape_cast %132 : vector<16xf32> to vector<16x1xf32>
    %cst_64 = arith.constant 3.125000e-02 : f32
    %134 = vector.broadcast %cst_64 : f32 to vector<16x1xf32>
    %135 = arith.mulf %133, %134 : vector<16x1xf32>
    %136 = arith.mulf %129, %129 : vector<16x128xf32>
    %cst_65 = arith.constant dense<0.000000e+00> : vector<16xf32>
    %137 = vector.multi_reduction <add>, %136, %cst_65 [1] : vector<16x128xf32> to vector<16xf32>
    %138 = vector.shape_cast %137 : vector<16xf32> to vector<16x1xf32>
    %cst_66 = arith.constant 3.125000e-02 : f32
    %139 = vector.broadcast %cst_66 : f32 to vector<16x1xf32>
    %140 = arith.mulf %138, %139 : vector<16x1xf32>
    %141 = arith.mulf %135, %135 : vector<16x1xf32>
    %142 = arith.subf %140, %141 : vector<16x1xf32>
    %cst_67 = arith.constant 0.000000e+00 : f32
    %143 = vector.broadcast %cst_67 : f32 to vector<16x1xf32>
    %144 = arith.maximumf %142, %143 : vector<16x1xf32>
    %145 = vector.broadcast %135 : vector<16x1xf32> to vector<16x128xf32>
    %146 = arith.subf %129, %145 : vector<16x128xf32>
    %cst_68 = arith.constant 9.99999993E-9 : f32
    %147 = vector.broadcast %cst_68 : f32 to vector<16x1xf32>
    %148 = arith.addf %144, %147 : vector<16x1xf32>
    %149 = math.rsqrt %148 : vector<16x1xf32>
    %150 = vector.broadcast %149 : vector<16x1xf32> to vector<16x128xf32>
    %151 = arith.mulf %146, %150 : vector<16x128xf32>
    %152 = vector.broadcast %130 : vector<1x128xf32> to vector<16x128xf32>
    %153 = arith.mulf %151, %152 : vector<16x128xf32>
    %154 = vector.broadcast %131 : vector<1x128xf32> to vector<16x128xf32>
    %155 = arith.addf %153, %154 : vector<16x128xf32>
    %156 = arith.truncf %155 : vector<16x128xf32> to vector<16x128xbf16>
    %157 = arith.truncf %129 : vector<16x128xf32> to vector<16x128xbf16>
    %c1_69 = arith.constant 1 : index
    %c0_70 = arith.constant 0 : index
    %c0_71 = arith.constant 0 : index
    %158 = vector.load %arg7[%c1_69, %c0_70, %c0_71] : memref<2x128x128xbf16, #tpu.memory_space<vmem>>, vector<1x128x128xbf16>
    %159 = vector.shape_cast %158 : vector<1x128x128xbf16> to vector<128x128xbf16>
    %cst_72 = arith.constant dense<0.000000e+00> : vector<16x128xf32>
    %160 = tpu.matmul %156, %159, %cst_72 {dimension_numbers = #tpu.dot_dimension_numbers<[1], [0], [0], [1], [0, 0, 1, 1], [], []>} : vector<16x128xbf16>, vector<128x128xbf16>, vector<16x128xf32> -> vector<16x128xf32>
    %c1_73 = arith.constant 1 : index
    %c0_74 = arith.constant 0 : index
    %161 = vector.load %arg9[%c1_73, %c0_74] : memref<2x128xf32, #tpu.memory_space<vmem>>, vector<1x128xf32>
    %162 = vector.broadcast %161 : vector<1x128xf32> to vector<16x128xf32>
    %163 = arith.addf %160, %162 : vector<16x128xf32>
    %c1_75 = arith.constant 1 : index
    %c0_76 = arith.constant 0 : index
    %c0_77 = arith.constant 0 : index
    %164 = vector.load %arg8[%c1_75, %c0_76, %c0_77] : memref<2x128x256xbf16, #tpu.memory_space<vmem>>, vector<1x128x256xbf16>
    %165 = vector.shape_cast %164 : vector<1x128x256xbf16> to vector<128x256xbf16>
    %cst_78 = arith.constant dense<0.000000e+00> : vector<16x256xf32>
    %166 = tpu.matmul %157, %165, %cst_78 {dimension_numbers = #tpu.dot_dimension_numbers<[1], [0], [0], [1], [0, 0, 1, 1], [], []>} : vector<16x128xbf16>, vector<128x256xbf16>, vector<16x256xf32> -> vector<16x256xf32>
    %c1_79 = arith.constant 1 : index
    %c0_80 = arith.constant 0 : index
    %167 = vector.load %arg10[%c1_79, %c0_80] : memref<2x256xf32, #tpu.memory_space<vmem>>, vector<1x256xf32>
    %168 = vector.broadcast %167 : vector<1x256xf32> to vector<16x256xf32>
    %169 = arith.addf %166, %168 : vector<16x256xf32>
    %170 = vector.extract_strided_slice %169 {offsets = [0, 0], sizes = [16, 128], strides = [1, 1]} : vector<16x256xf32> to vector<16x128xf32>
    %171 = vector.extract_strided_slice %169 {offsets = [0, 128], sizes = [16, 128], strides = [1, 1]} : vector<16x256xf32> to vector<16x128xf32>
    %172 = vector.shape_cast %163 : vector<16x128xf32> to vector<2x8x128xf32>
    %173 = arith.truncf %172 : vector<2x8x128xf32> to vector<2x8x128xbf16>
    %174 = vector.shape_cast %170 : vector<16x128xf32> to vector<2x8x128xf32>
    %175 = arith.truncf %174 : vector<2x8x128xf32> to vector<2x8x128xbf16>
    %176 = vector.shape_cast %171 : vector<16x128xf32> to vector<2x8x128xf32>
    %177 = arith.truncf %176 : vector<2x8x128xf32> to vector<2x8x128xbf16>
    "tpu.trace_start"() <{level = 10 : i32, message = "bqd,bkd->bqk"}> : () -> ()
    %cst_81 = arith.constant dense<0.000000e+00> : vector<2x8x8xf32>
    %178 = tpu.matmul %173, %175, %cst_81 {dimension_numbers = #tpu.dot_dimension_numbers<[2], [2], [1], [1], [0, 0, 0, 1, 1, 1], [0], [0]>} : vector<2x8x128xbf16>, vector<2x8x128xbf16>, vector<2x8x8xf32> -> vector<2x8x8xf32>
    %cst_82 = arith.constant -1.000000e+30 : f32
    "tpu.trace_stop"() : () -> ()
    %179 = vector.shape_cast %10 : vector<1x8x8xi1> to vector<1x8x8xi1>
    %180 = vector.broadcast %179 : vector<1x8x8xi1> to vector<2x8x8xi1>
    %181 = vector.broadcast %cst_82 : f32 to vector<2x8x8xf32>
    %182 = arith.select %180, %178, %181 : vector<2x8x8xi1>, vector<2x8x8xf32>
    %cst_83 = arith.constant dense<0xFF800000> : vector<2x8xf32>
    %183 = vector.multi_reduction <maximumf>, %182, %cst_83 [2] : vector<2x8x8xf32> to vector<2x8xf32>
    %184 = vector.shape_cast %183 : vector<2x8xf32> to vector<2x8x1xf32>
    %185 = vector.broadcast %184 : vector<2x8x1xf32> to vector<2x8x8xf32>
    %186 = arith.subf %182, %185 : vector<2x8x8xf32>
    %187 = math.exp %186 : vector<2x8x8xf32>
    %cst_84 = arith.constant dense<0.000000e+00> : vector<2x8xf32>
    %188 = vector.multi_reduction <add>, %187, %cst_84 [2] : vector<2x8x8xf32> to vector<2x8xf32>
    %189 = vector.shape_cast %188 : vector<2x8xf32> to vector<2x8x1xf32>
    %190 = tpu.reciprocal %189 {approx = true} : vector<2x8x1xf32> -> vector<2x8x1xf32>
    %191 = vector.broadcast %190 : vector<2x8x1xf32> to vector<2x8x8xf32>
    %192 = arith.mulf %187, %191 : vector<2x8x8xf32>
    %193 = arith.truncf %192 : vector<2x8x8xf32> to vector<2x8x8xbf16>
    "tpu.trace_start"() <{level = 10 : i32, message = "bqk,bkd->bqd"}> : () -> ()
    %cst_85 = arith.constant dense<0.000000e+00> : vector<2x8x128xf32>
    %194 = tpu.matmul %193, %177, %cst_85 {dimension_numbers = #tpu.dot_dimension_numbers<[2], [1], [1], [2], [0, 0, 0, 1, 1, 2], [0], [0]>} : vector<2x8x8xbf16>, vector<2x8x128xbf16>, vector<2x8x128xf32> -> vector<2x8x128xf32>
    "tpu.trace_stop"() : () -> ()
    %195 = vector.shape_cast %194 : vector<2x8x128xf32> to vector<16x128xf32>
    %196 = arith.truncf %195 : vector<16x128xf32> to vector<16x128xbf16>
    %c1_86 = arith.constant 1 : index
    %c0_87 = arith.constant 0 : index
    %c0_88 = arith.constant 0 : index
    %197 = vector.load %arg11[%c1_86, %c0_87, %c0_88] : memref<2x128x128xbf16, #tpu.memory_space<vmem>>, vector<1x128x128xbf16>
    %198 = vector.shape_cast %197 : vector<1x128x128xbf16> to vector<128x128xbf16>
    %cst_89 = arith.constant dense<0.000000e+00> : vector<16x128xf32>
    %199 = tpu.matmul %196, %198, %cst_89 {dimension_numbers = #tpu.dot_dimension_numbers<[1], [0], [0], [1], [0, 0, 1, 1], [], []>} : vector<16x128xbf16>, vector<128x128xbf16>, vector<16x128xf32> -> vector<16x128xf32>
    %c1_90 = arith.constant 1 : index
    %c0_91 = arith.constant 0 : index
    %200 = vector.load %arg12[%c1_90, %c0_91] : memref<2x128xf32, #tpu.memory_space<vmem>>, vector<1x128xf32>
    %201 = vector.broadcast %200 : vector<1x128xf32> to vector<16x128xf32>
    %202 = arith.addf %199, %201 : vector<16x128xf32>
    %203 = arith.addf %155, %202 : vector<16x128xf32>
    %c1_92 = arith.constant 1 : index
    %c0_93 = arith.constant 0 : index
    %204 = vector.load %arg13[%c1_92, %c0_93] : memref<2x128xf32, #tpu.memory_space<vmem>>, vector<1x128xf32>
    %c1_94 = arith.constant 1 : index
    %c0_95 = arith.constant 0 : index
    %205 = vector.load %arg14[%c1_94, %c0_95] : memref<2x128xf32, #tpu.memory_space<vmem>>, vector<1x128xf32>
    %cst_96 = arith.constant dense<0.000000e+00> : vector<16xf32>
    %206 = vector.multi_reduction <add>, %203, %cst_96 [1] : vector<16x128xf32> to vector<16xf32>
    %207 = vector.shape_cast %206 : vector<16xf32> to vector<16x1xf32>
    %cst_97 = arith.constant 3.125000e-02 : f32
    %208 = vector.broadcast %cst_97 : f32 to vector<16x1xf32>
    %209 = arith.mulf %207, %208 : vector<16x1xf32>
    %210 = arith.mulf %203, %203 : vector<16x128xf32>
    %cst_98 = arith.constant dense<0.000000e+00> : vector<16xf32>
    %211 = vector.multi_reduction <add>, %210, %cst_98 [1] : vector<16x128xf32> to vector<16xf32>
    %212 = vector.shape_cast %211 : vector<16xf32> to vector<16x1xf32>
    %cst_99 = arith.constant 3.125000e-02 : f32
    %213 = vector.broadcast %cst_99 : f32 to vector<16x1xf32>
    %214 = arith.mulf %212, %213 : vector<16x1xf32>
    %215 = arith.mulf %209, %209 : vector<16x1xf32>
    %216 = arith.subf %214, %215 : vector<16x1xf32>
    %cst_100 = arith.constant 0.000000e+00 : f32
    %217 = vector.broadcast %cst_100 : f32 to vector<16x1xf32>
    %218 = arith.maximumf %216, %217 : vector<16x1xf32>
    %219 = vector.broadcast %209 : vector<16x1xf32> to vector<16x128xf32>
    %220 = arith.subf %203, %219 : vector<16x128xf32>
    %cst_101 = arith.constant 9.99999993E-9 : f32
    %221 = vector.broadcast %cst_101 : f32 to vector<16x1xf32>
    %222 = arith.addf %218, %221 : vector<16x1xf32>
    %223 = math.rsqrt %222 : vector<16x1xf32>
    %224 = vector.broadcast %223 : vector<16x1xf32> to vector<16x128xf32>
    %225 = arith.mulf %220, %224 : vector<16x128xf32>
    %226 = vector.broadcast %204 : vector<1x128xf32> to vector<16x128xf32>
    %227 = arith.mulf %225, %226 : vector<16x128xf32>
    %228 = vector.broadcast %205 : vector<1x128xf32> to vector<16x128xf32>
    %229 = arith.addf %227, %228 : vector<16x128xf32>
    %230 = arith.truncf %229 : vector<16x128xf32> to vector<16x128xbf16>
    %c1_102 = arith.constant 1 : index
    %c0_103 = arith.constant 0 : index
    %c0_104 = arith.constant 0 : index
    %231 = vector.load %arg15[%c1_102, %c0_103, %c0_104] : memref<2x128x128xbf16, #tpu.memory_space<vmem>>, vector<1x128x128xbf16>
    %232 = vector.shape_cast %231 : vector<1x128x128xbf16> to vector<128x128xbf16>
    %cst_105 = arith.constant dense<0.000000e+00> : vector<16x128xf32>
    %233 = tpu.matmul %230, %232, %cst_105 {dimension_numbers = #tpu.dot_dimension_numbers<[1], [0], [0], [1], [0, 0, 1, 1], [], []>} : vector<16x128xbf16>, vector<128x128xbf16>, vector<16x128xf32> -> vector<16x128xf32>
    %c1_106 = arith.constant 1 : index
    %c0_107 = arith.constant 0 : index
    %234 = vector.load %arg16[%c1_106, %c0_107] : memref<2x128xf32, #tpu.memory_space<vmem>>, vector<1x128xf32>
    %235 = vector.broadcast %234 : vector<1x128xf32> to vector<16x128xf32>
    %236 = arith.addf %233, %235 : vector<16x128xf32>
    %cst_108 = arith.constant 0.000000e+00 : f32
    %237 = vector.broadcast %cst_108 : f32 to vector<16x128xf32>
    %238 = arith.maximumf %236, %237 : vector<16x128xf32>
    %239 = arith.truncf %238 : vector<16x128xf32> to vector<16x128xbf16>
    %c1_109 = arith.constant 1 : index
    %c0_110 = arith.constant 0 : index
    %c0_111 = arith.constant 0 : index
    %240 = vector.load %arg17[%c1_109, %c0_110, %c0_111] : memref<2x128x128xbf16, #tpu.memory_space<vmem>>, vector<1x128x128xbf16>
    %241 = vector.shape_cast %240 : vector<1x128x128xbf16> to vector<128x128xbf16>
    %cst_112 = arith.constant dense<0.000000e+00> : vector<16x128xf32>
    %242 = tpu.matmul %239, %241, %cst_112 {dimension_numbers = #tpu.dot_dimension_numbers<[1], [0], [0], [1], [0, 0, 1, 1], [], []>} : vector<16x128xbf16>, vector<128x128xbf16>, vector<16x128xf32> -> vector<16x128xf32>
    %c1_113 = arith.constant 1 : index
    %c0_114 = arith.constant 0 : index
    %243 = vector.load %arg18[%c1_113, %c0_114] : memref<2x128xf32, #tpu.memory_space<vmem>>, vector<1x128xf32>
    %244 = vector.broadcast %243 : vector<1x128xf32> to vector<16x128xf32>
    %245 = arith.addf %242, %244 : vector<16x128xf32>
    %246 = arith.addf %245, %229 : vector<16x128xf32>
    %247 = vector.broadcast %4 : vector<16x1xf32> to vector<16x128xf32>
    %248 = arith.mulf %246, %247 : vector<16x128xf32>
    %c0_115 = arith.constant 0 : index
    %c0_116 = arith.constant 0 : index
    %249 = vector.load %arg19[%c0_115, %c0_116] : memref<1x128xf32, #tpu.memory_space<vmem>>, vector<1x128xf32>
    %c0_117 = arith.constant 0 : index
    %c0_118 = arith.constant 0 : index
    %250 = vector.load %arg20[%c0_117, %c0_118] : memref<1x128xf32, #tpu.memory_space<vmem>>, vector<1x128xf32>
    %cst_119 = arith.constant dense<0.000000e+00> : vector<16xf32>
    %251 = vector.multi_reduction <add>, %248, %cst_119 [1] : vector<16x128xf32> to vector<16xf32>
    %252 = vector.shape_cast %251 : vector<16xf32> to vector<16x1xf32>
    %cst_120 = arith.constant 3.125000e-02 : f32
    %253 = vector.broadcast %cst_120 : f32 to vector<16x1xf32>
    %254 = arith.mulf %252, %253 : vector<16x1xf32>
    %255 = arith.mulf %248, %248 : vector<16x128xf32>
    %cst_121 = arith.constant dense<0.000000e+00> : vector<16xf32>
    %256 = vector.multi_reduction <add>, %255, %cst_121 [1] : vector<16x128xf32> to vector<16xf32>
    %257 = vector.shape_cast %256 : vector<16xf32> to vector<16x1xf32>
    %cst_122 = arith.constant 3.125000e-02 : f32
    %258 = vector.broadcast %cst_122 : f32 to vector<16x1xf32>
    %259 = arith.mulf %257, %258 : vector<16x1xf32>
    %260 = arith.mulf %254, %254 : vector<16x1xf32>
    %261 = arith.subf %259, %260 : vector<16x1xf32>
    %cst_123 = arith.constant 0.000000e+00 : f32
    %262 = vector.broadcast %cst_123 : f32 to vector<16x1xf32>
    %263 = arith.maximumf %261, %262 : vector<16x1xf32>
    %264 = vector.broadcast %254 : vector<16x1xf32> to vector<16x128xf32>
    %265 = arith.subf %248, %264 : vector<16x128xf32>
    %cst_124 = arith.constant 9.99999993E-9 : f32
    %266 = vector.broadcast %cst_124 : f32 to vector<16x1xf32>
    %267 = arith.addf %263, %266 : vector<16x1xf32>
    %268 = math.rsqrt %267 : vector<16x1xf32>
    %269 = vector.broadcast %268 : vector<16x1xf32> to vector<16x128xf32>
    %270 = arith.mulf %265, %269 : vector<16x128xf32>
    %271 = vector.broadcast %249 : vector<1x128xf32> to vector<16x128xf32>
    %272 = arith.mulf %270, %271 : vector<16x128xf32>
    %273 = vector.broadcast %250 : vector<1x128xf32> to vector<16x128xf32>
    %274 = arith.addf %272, %273 : vector<16x128xf32>
    %275 = vector.shape_cast %274 : vector<16x128xf32> to vector<2x8x128xf32>
    %c0_125 = arith.constant 0 : index
    %c0_126 = arith.constant 0 : index
    %c0_127 = arith.constant 0 : index
    %276 = vector.load %arg3[%c0_125, %c0_126, %c0_127] : memref<2x8x128xbf16, #tpu.memory_space<vmem>>, vector<2x8x128xbf16>
    %277 = arith.extf %276 : vector<2x8x128xbf16> to vector<2x8x128xf32>
    %278 = arith.mulf %275, %277 : vector<2x8x128xf32>
    %cst_128 = arith.constant dense<0.000000e+00> : vector<2x8xf32>
    %279 = vector.multi_reduction <add>, %278, %cst_128 [2] : vector<2x8x128xf32> to vector<2x8xf32>
    %c0_129 = arith.constant 0 : index
    %c0_130 = arith.constant 0 : index
    %c0_131 = arith.constant 0 : index
    %280 = vector.load %arg21[%c0_129, %c0_130, %c0_131] : memref<1x2x8xf32, #tpu.memory_space<vmem>>, vector<1x2x8xf32>
    %281 = vector.shape_cast %280 : vector<1x2x8xf32> to vector<2x8xf32>
    %282 = vector.shape_cast %279 : vector<2x8xf32> to vector<1x2x8xf32>
    tpu.vector_store %arg21[%c0_129, %c0_130, %c0_131], %282 {strides = array<i32>} : memref<1x2x8xf32, #tpu.memory_space<vmem>>, vector<1x2x8xf32>,
    %c0_132 = arith.constant 0 : index
    %c0_133 = arith.constant 0 : index
    %c0_134 = arith.constant 0 : index
    %283 = vector.load %arg4[%c0_132, %c0_133, %c0_134] : memref<2x8x128xbf16, #tpu.memory_space<vmem>>, vector<2x8x128xbf16>
    %284 = arith.extf %283 : vector<2x8x128xbf16> to vector<2x8x128xf32>
    %285 = arith.mulf %275, %284 : vector<2x8x128xf32>
    %cst_135 = arith.constant dense<0.000000e+00> : vector<2x8xf32>
    %286 = vector.multi_reduction <add>, %285, %cst_135 [2] : vector<2x8x128xf32> to vector<2x8xf32>
    %c0_136 = arith.constant 0 : index
    %c0_137 = arith.constant 0 : index
    %c0_138 = arith.constant 0 : index
    %287 = vector.load %arg22[%c0_136, %c0_137, %c0_138] : memref<1x2x8xf32, #tpu.memory_space<vmem>>, vector<1x2x8xf32>
    %288 = vector.shape_cast %287 : vector<1x2x8xf32> to vector<2x8xf32>
    %289 = vector.shape_cast %286 : vector<2x8xf32> to vector<1x2x8xf32>
    tpu.vector_store %arg22[%c0_136, %c0_137, %c0_138], %289 {strides = array<i32>} : memref<1x2x8xf32, #tpu.memory_space<vmem>>, vector<1x2x8xf32>,
    return
  }
  func.func @transform_0(%arg0: i32) -> (i32, i32, i32) {
    %c0_i32 = arith.constant 0 : i32
    %c0_i32_0 = arith.constant 0 : i32
    %c0_i32_1 = arith.constant 0 : i32
    return %arg0, %c0_i32, %c0_i32_0 : i32, i32, i32
  }
  func.func @transform_1(%arg0: i32) -> (i32, i32, i32) {
    %c0_i32 = arith.constant 0 : i32
    %c0_i32_0 = arith.constant 0 : i32
    %c0_i32_1 = arith.constant 0 : i32
    return %arg0, %c0_i32, %c0_i32_0 : i32, i32, i32
  }
  func.func @transform_2(%arg0: i32) -> (i32, i32, i32) {
    %c0_i32 = arith.constant 0 : i32
    %c0_i32_0 = arith.constant 0 : i32
    %c0_i32_1 = arith.constant 0 : i32
    return %arg0, %c0_i32, %c0_i32_0 : i32, i32, i32
  }
  func.func @transform_3(%arg0: i32) -> (i32, i32, i32) {
    %c0_i32 = arith.constant 0 : i32
    %c0_i32_0 = arith.constant 0 : i32
    %c0_i32_1 = arith.constant 0 : i32
    return %arg0, %c0_i32, %c0_i32_0 : i32, i32, i32
  }
  func.func @transform_4(%arg0: i32) -> (i32, i32) {
    %c0_i32 = arith.constant 0 : i32
    %c0_i32_0 = arith.constant 0 : i32
    %c0_i32_1 = arith.constant 0 : i32
    return %c0_i32, %c0_i32_0 : i32, i32
  }
  func.func @transform_5(%arg0: i32) -> (i32, i32) {
    %c0_i32 = arith.constant 0 : i32
    %c0_i32_0 = arith.constant 0 : i32
    %c0_i32_1 = arith.constant 0 : i32
    return %c0_i32, %c0_i32_0 : i32, i32
  }
  func.func @transform_6(%arg0: i32) -> (i32, i32, i32) {
    %c0_i32 = arith.constant 0 : i32
    %c0_i32_0 = arith.constant 0 : i32
    %c0_i32_1 = arith.constant 0 : i32
    %c0_i32_2 = arith.constant 0 : i32
    return %c0_i32, %c0_i32_0, %c0_i32_1 : i32, i32, i32
  }
  func.func @transform_7(%arg0: i32) -> (i32, i32, i32) {
    %c0_i32 = arith.constant 0 : i32
    %c0_i32_0 = arith.constant 0 : i32
    %c0_i32_1 = arith.constant 0 : i32
    %c0_i32_2 = arith.constant 0 : i32
    return %c0_i32, %c0_i32_0, %c0_i32_1 : i32, i32, i32
  }
  func.func @transform_8(%arg0: i32) -> (i32, i32) {
    %c0_i32 = arith.constant 0 : i32
    %c0_i32_0 = arith.constant 0 : i32
    %c0_i32_1 = arith.constant 0 : i32
    return %c0_i32, %c0_i32_0 : i32, i32
  }
  func.func @transform_9(%arg0: i32) -> (i32, i32) {
    %c0_i32 = arith.constant 0 : i32
    %c0_i32_0 = arith.constant 0 : i32
    %c0_i32_1 = arith.constant 0 : i32
    return %c0_i32, %c0_i32_0 : i32, i32
  }
  func.func @transform_10(%arg0: i32) -> (i32, i32, i32) {
    %c0_i32 = arith.constant 0 : i32
    %c0_i32_0 = arith.constant 0 : i32
    %c0_i32_1 = arith.constant 0 : i32
    %c0_i32_2 = arith.constant 0 : i32
    return %c0_i32, %c0_i32_0, %c0_i32_1 : i32, i32, i32
  }
  func.func @transform_11(%arg0: i32) -> (i32, i32) {
    %c0_i32 = arith.constant 0 : i32
    %c0_i32_0 = arith.constant 0 : i32
    %c0_i32_1 = arith.constant 0 : i32
    return %c0_i32, %c0_i32_0 : i32, i32
  }
  func.func @transform_12(%arg0: i32) -> (i32, i32) {
    %c0_i32 = arith.constant 0 : i32
    %c0_i32_0 = arith.constant 0 : i32
    %c0_i32_1 = arith.constant 0 : i32
    return %c0_i32, %c0_i32_0 : i32, i32
  }
  func.func @transform_13(%arg0: i32) -> (i32, i32) {
    %c0_i32 = arith.constant 0 : i32
    %c0_i32_0 = arith.constant 0 : i32
    %c0_i32_1 = arith.constant 0 : i32
    return %c0_i32, %c0_i32_0 : i32, i32
  }
  func.func @transform_14(%arg0: i32) -> (i32, i32, i32) {
    %c0_i32 = arith.constant 0 : i32
    %c0_i32_0 = arith.constant 0 : i32
    %c0_i32_1 = arith.constant 0 : i32
    %c0_i32_2 = arith.constant 0 : i32
    return %c0_i32, %c0_i32_0, %c0_i32_1 : i32, i32, i32
  }
  func.func @transform_15(%arg0: i32) -> (i32, i32) {
    %c0_i32 = arith.constant 0 : i32
    %c0_i32_0 = arith.constant 0 : i32
    %c0_i32_1 = arith.constant 0 : i32
    return %c0_i32, %c0_i32_0 : i32, i32
  }
  func.func @transform_16(%arg0: i32) -> (i32, i32, i32) {
    %c0_i32 = arith.constant 0 : i32
    %c0_i32_0 = arith.constant 0 : i32
    %c0_i32_1 = arith.constant 0 : i32
    %c0_i32_2 = arith.constant 0 : i32
    return %c0_i32, %c0_i32_0, %c0_i32_1 : i32, i32, i32
  }
  func.func @transform_17(%arg0: i32) -> (i32, i32) {
    %c0_i32 = arith.constant 0 : i32
    %c0_i32_0 = arith.constant 0 : i32
    %c0_i32_1 = arith.constant 0 : i32
    return %c0_i32, %c0_i32_0 : i32, i32
  }
  func.func @transform_18(%arg0: i32) -> (i32, i32) {
    %c0_i32 = arith.constant 0 : i32
    %c0_i32_0 = arith.constant 0 : i32
    %c0_i32_1 = arith.constant 0 : i32
    return %c0_i32, %c0_i32_0 : i32, i32
  }
  func.func @transform_19(%arg0: i32) -> (i32, i32) {
    %c0_i32 = arith.constant 0 : i32
    %c0_i32_0 = arith.constant 0 : i32
    %c0_i32_1 = arith.constant 0 : i32
    return %c0_i32, %c0_i32_0 : i32, i32
  }
  func.func @transform_20(%arg0: i32) -> (i32, i32, i32) {
    %c0_i32 = arith.constant 0 : i32
    %c0_i32_0 = arith.constant 0 : i32
    %c0_i32_1 = arith.constant 0 : i32
    return %arg0, %c0_i32, %c0_i32_0 : i32, i32, i32
  }
  func.func @transform_21(%arg0: i32) -> (i32, i32, i32) {
    %c0_i32 = arith.constant 0 : i32
    %c0_i32_0 = arith.constant 0 : i32
    %c0_i32_1 = arith.constant 0 : i32
    return %arg0, %c0_i32, %c0_i32_0 : i32, i32, i32
  }
}

</mosaic_0001>

<llo_original>
// kernel: tpu_custom_call.1
$region0: #{tpu_custom_call.1}
  #allocation0 [shape = 'u32[]', space=smem, size = 0x4, offset = 0x4, fixed_abs, tag = 'smem constant byte address 0x4 - core index']
  #allocation1 [shape = 'u32[144,128]{1,0:T(1,128)}', space=vmem, size = 0x12000, scoped, tag = 'internal scratch']
  %s0 = inlined_call_operand.vmem [shape: bf16[2,8,128], index: 0, kind: input, shape index: {}]
  %s1 = inlined_call_operand.vmem [shape: f32[2,8,1], index: 1, kind: input, shape index: {}]
  %s2 = inlined_call_operand.vmem [shape: bf16[2,8,128], index: 2, kind: input, shape index: {}]
  %s3 = inlined_call_operand.hbm [shape: bf16[2,8,128], index: 3, kind: input, shape index: {}]
  %s4 = inlined_call_operand.vmem [shape: f32[2,128], index: 4, kind: input, shape index: {}]
  %s5 = inlined_call_operand.vmem [shape: f32[2,128], index: 5, kind: input, shape index: {}]
  %s6 = inlined_call_operand.hbm [shape: bf16[2,128,128], index: 6, kind: input, shape index: {}]
  %s7 = inlined_call_operand.hbm [shape: bf16[2,128,256], index: 7, kind: input, shape index: {}]
  %s8 = inlined_call_operand.vmem [shape: f32[2,128], index: 8, kind: input, shape index: {}]
  %s9 = inlined_call_operand.vmem [shape: f32[2,256], index: 9, kind: input, shape index: {}]
  %s10 = inlined_call_operand.hbm [shape: bf16[2,128,128], index: 10, kind: input, shape index: {}]
  %s11 = inlined_call_operand.vmem [shape: f32[2,128], index: 11, kind: input, shape index: {}]
  %s12 = inlined_call_operand.vmem [shape: f32[2,128], index: 12, kind: input, shape index: {}]
  %s13 = inlined_call_operand.vmem [shape: f32[2,128], index: 13, kind: input, shape index: {}]
  %s14 = inlined_call_operand.hbm [shape: bf16[2,128,128], index: 14, kind: input, shape index: {}]
  %s15 = inlined_call_operand.vmem [shape: f32[2,128], index: 15, kind: input, shape index: {}]
  %s16 = inlined_call_operand.hbm [shape: bf16[2,128,128], index: 16, kind: input, shape index: {}]
  %s17 = inlined_call_operand.vmem [shape: f32[2,128], index: 17, kind: input, shape index: {}]
  %s18 = inlined_call_operand.vmem [shape: f32[1,128], index: 18, kind: input, shape index: {}]
  %s19 = inlined_call_operand.vmem [shape: f32[1,128], index: 19, kind: input, shape index: {}]
  %s20 = inlined_call_operand.hbm [shape: f32[1,2,8], index: 20, kind: output, shape index: {0}]
  %s21 = inlined_call_operand.hbm [shape: f32[1,2,8], index: 21, kind: output, shape index: {1}]
  %22 = xla_tuple %s20, %s21
  %s23 = sld [smem:[#allocation0]]
  $region122: #{tpu_custom_call.1} parent=0
    _
  %s25 = ssub.s32 1, %s23
  %s26 = scalar_select 0, %s25, %s23
  $region1: #{tpu_custom_call.1} parent=0
    #allocation2 [shape = 'u8[4096]{0}', space=vmem, size = 0x1000, scoped, tag = 'input window, operand 3, single buffered']
    #allocation3 [shape = 's32[1]{0}', space=sflag, size = 0x4, scoped, tag = 'scoped memory for tpu_custom_call.1']
    #allocation4 [shape = 's32[1]{0}', space=sflag, size = 0x4, scoped, tag = 'scoped memory for tpu_custom_call.1']
    #allocation5 [shape = 'u8[65536]{0}', space=vmem, size = 0x10000, scoped, tag = 'input window, operand 6, single buffered']
    #allocation6 [shape = 's32[1]{0}', space=sflag, size = 0x4, scoped, tag = 'scoped memory for tpu_custom_call.1']
    #allocation7 [shape = 'u8[131072]{0}', space=vmem, size = 0x20000, scoped, tag = 'input window, operand 7, single buffered']
    #allocation8 [shape = 'u8[65536]{0}', space=vmem, size = 0x10000, scoped, tag = 'input window, operand 10, single buffered']
    #allocation9 [shape = 's32[1]{0}', space=sflag, size = 0x4, scoped, tag = 'scoped memory for tpu_custom_call.1']
    #allocation10 [shape = 'u8[65536]{0}', space=vmem, size = 0x10000, scoped, tag = 'input window, operand 14, single buffered']
    #allocation11 [shape = 'u8[65536]{0}', space=vmem, size = 0x10000, scoped, tag = 'input window, operand 16, single buffered']
    #allocation12 [shape = 's32[1]{0}', space=sflag, size = 0x4, scoped, tag = 'scoped memory for tpu_custom_call.1']
    #allocation13 [shape = 'u8[1024]{0}', space=vmem, size = 0x400, scoped, tag = 'output window, operand 0, single buffered']
    #allocation14 [shape = 'u8[1024]{0}', space=vmem, size = 0x400, scoped, tag = 'output window, operand 1, single buffered']
    #allocation15 [shape = 's32[1]{0}', space=sflag, size = 0x4, scoped, tag = 'scoped memory for tpu_custom_call.1']
    %27 = vsyncpa [#allocation3], 0
    %28 = vsyncpa [#allocation6], 0
    %29 = vsyncpa [#allocation9], 0
    %30 = vsyncpa [#allocation12], 0
    %31 = vsyncpa [#allocation4], 0
    %32 = vsyncpa [#allocation15], 0
    // Predicated region
    $region2: #{tpu_custom_call.1} parent=1 // pred_check
      _
    $region3: #{tpu_custom_call.1} parent=1 // pred_check_branch
      %34 = sbr.rel (0) target = $region5
    $region4: #{tpu_custom_call.1} parent=1 // pred_region
      _
    $region5: #{tpu_custom_call.1} parent=1 // pred_fallthru
      _
    // Predicated region
    $region6: #{tpu_custom_call.1} parent=1 // pred_check
      _
    $region7: #{tpu_custom_call.1} parent=1 // pred_check_branch
      %36 = sbr.rel (0) target = $region9
    $region8: #{tpu_custom_call.1} parent=1 // pred_region
      _
    $region9: #{tpu_custom_call.1} parent=1 // pred_fallthru
      _
    // Predicated region
    $region10: #{tpu_custom_call.1} parent=1 // pred_check
      _
    $region11: #{tpu_custom_call.1} parent=1 // pred_check_branch
      %38 = sbr.rel (0) target = $region13
    $region12: #{tpu_custom_call.1} parent=1 // pred_region
      _
    $region13: #{tpu_custom_call.1} parent=1 // pred_fallthru
      _
    // Predicated region
    $region14: #{tpu_custom_call.1} parent=1 // pred_check
      _
    $region15: #{tpu_custom_call.1} parent=1 // pred_check_branch
      %40 = sbr.rel (0) target = $region17
    $region16: #{tpu_custom_call.1} parent=1 // pred_region
      %s42 = ssub.s32 128, 128
      %43 = vsyncadd [#allocation3], %s42
      %s44 = sshll.u32 [#allocation2], 4
      %s45 = int_to_ptr.vmem [resolvable:$true] %s44
      %50 = dma.hbm_to_vmem [thread:$0]  %s3, 128, %s45, [#allocation3], 64, 64, 4
    $region17: #{tpu_custom_call.1} parent=1 // pred_fallthru
      _
    // Predicated region
    $region18: #{tpu_custom_call.1} parent=1 // pred_check
      _
    $region19: #{tpu_custom_call.1} parent=1 // pred_check_branch
      %52 = sbr.rel (0) target = $region21
    $region20: #{tpu_custom_call.1} parent=1 // pred_region
      _
    $region21: #{tpu_custom_call.1} parent=1 // pred_fallthru
      _
    // Predicated region
    $region22: #{tpu_custom_call.1} parent=1 // pred_check
      _
    $region23: #{tpu_custom_call.1} parent=1 // pred_check_branch
      %54 = sbr.rel (0) target = $region25
    $region24: #{tpu_custom_call.1} parent=1 // pred_region
      _
    $region25: #{tpu_custom_call.1} parent=1 // pred_fallthru
      _
    // Predicated region
    $region26: #{tpu_custom_call.1} parent=1 // pred_check
      _
    $region27: #{tpu_custom_call.1} parent=1 // pred_check_branch
      %56 = sbr.rel (0) target = $region29
    $region28: #{tpu_custom_call.1} parent=1 // pred_region
      %s58 = ssub.s32 2048, 2048
      %59 = vsyncadd [#allocation6], %s58
      %s60 = sshll.u32 [#allocation5], 4
      %s61 = int_to_ptr.vmem [resolvable:$true] %s60
      %66 = dma.hbm_to_vmem [thread:$0]  %s6, 2048, %s61, [#allocation6], 64, 64, 4
    $region29: #{tpu_custom_call.1} parent=1 // pred_fallthru
      _
    // Predicated region
    $region30: #{tpu_custom_call.1} parent=1 // pred_check
      _
    $region31: #{tpu_custom_call.1} parent=1 // pred_check_branch
      %68 = sbr.rel (0) target = $region33
    $region32: #{tpu_custom_call.1} parent=1 // pred_region
      %s70 = ssub.s32 4096, 4096
      %71 = vsyncadd [#allocation6], %s70
      %s72 = sshll.u32 [#allocation7], 4
      %s73 = int_to_ptr.vmem [resolvable:$true] %s72
      %78 = dma.hbm_to_vmem [thread:$0]  %s7, 4096, %s73, [#allocation6], 128, 128, 8
    $region33: #{tpu_custom_call.1} parent=1 // pred_fallthru
      _
    // Predicated region
    $region34: #{tpu_custom_call.1} parent=1 // pred_check
      _
    $region35: #{tpu_custom_call.1} parent=1 // pred_check_branch
      %80 = sbr.rel (0) target = $region37
    $region36: #{tpu_custom_call.1} parent=1 // pred_region
      _
    $region37: #{tpu_custom_call.1} parent=1 // pred_fallthru
      _
    // Predicated region
    $region38: #{tpu_custom_call.1} parent=1 // pred_check
      _
    $region39: #{tpu_custom_call.1} parent=1 // pred_check_branch
      %82 = sbr.rel (0) target = $region41
    $region40: #{tpu_custom_call.1} parent=1 // pred_region
      _
    $region41: #{tpu_custom_call.1} parent=1 // pred_fallthru
      _
    // Predicated region
    $region42: #{tpu_custom_call.1} parent=1 // pred_check
      _
    $region43: #{tpu_custom_call.1} parent=1 // pred_check_branch
      %84 = sbr.rel (0) target = $region45
    $region44: #{tpu_custom_call.1} parent=1 // pred_region
      %s86 = ssub.s32 2048, 2048
      %87 = vsyncadd [#allocation9], %s86
      %s88 = sshll.u32 [#allocation8], 4
      %s89 = int_to_ptr.vmem [resolvable:$true] %s88
      %94 = dma.hbm_to_vmem [thread:$0]  %s10, 2048, %s89, [#allocation9], 64, 64, 4
    $region45: #{tpu_custom_call.1} parent=1 // pred_fallthru
      _
    // Predicated region
    $region46: #{tpu_custom_call.1} parent=1 // pred_check
      _
    $region47: #{tpu_custom_call.1} parent=1 // pred_check_branch
      %96 = sbr.rel (0) target = $region49
    $region48: #{tpu_custom_call.1} parent=1 // pred_region
      _
    $region49: #{tpu_custom_call.1} parent=1 // pred_fallthru
      _
    // Predicated region
    $region50: #{tpu_custom_call.1} parent=1 // pred_check
      _
    $region51: #{tpu_custom_call.1} parent=1 // pred_check_branch
      %98 = sbr.rel (0) target = $region53
    $region52: #{tpu_custom_call.1} parent=1 // pred_region
      _
    $region53: #{tpu_custom_call.1} parent=1 // pred_fallthru
      _
    // Predicated region
    $region54: #{tpu_custom_call.1} parent=1 // pred_check
      _
    $region55: #{tpu_custom_call.1} parent=1 // pred_check_branch
      %100 = sbr.rel (0) target = $region57
    $region56: #{tpu_custom_call.1} parent=1 // pred_region
      _
    $region57: #{tpu_custom_call.1} parent=1 // pred_fallthru
      _
    // Predicated region
    $region58: #{tpu_custom_call.1} parent=1 // pred_check
      _
    $region59: #{tpu_custom_call.1} parent=1 // pred_check_branch
      %102 = sbr.rel (0) target = $region61
    $region60: #{tpu_custom_call.1} parent=1 // pred_region
      %s104 = ssub.s32 2048, 2048
      %105 = vsyncadd [#allocation9], %s104
      %s106 = sshll.u32 [#allocation10], 4
      %s107 = int_to_ptr.vmem [resolvable:$true] %s106
      %112 = dma.hbm_to_vmem [thread:$0]  %s14, 2048, %s107, [#allocation9], 64, 64, 4
    $region61: #{tpu_custom_call.1} parent=1 // pred_fallthru
      _
    // Predicated region
    $region62: #{tpu_custom_call.1} parent=1 // pred_check
      _
    $region63: #{tpu_custom_call.1} parent=1 // pred_check_branch
      %114 = sbr.rel (0) target = $region65
    $region64: #{tpu_custom_call.1} parent=1 // pred_region
      _
    $region65: #{tpu_custom_call.1} parent=1 // pred_fallthru
      _
    // Predicated region
    $region66: #{tpu_custom_call.1} parent=1 // pred_check
      _
    $region67: #{tpu_custom_call.1} parent=1 // pred_check_branch
      %116 = sbr.rel (0) target = $region69
    $region68: #{tpu_custom_call.1} parent=1 // pred_region
      %s118 = ssub.s32 2048, 2048
      %119 = vsyncadd [#allocation12], %s118
      %s120 = sshll.u32 [#allocation11], 4
      %s121 = int_to_ptr.vmem [resolvable:$true] %s120
      %126 = dma.hbm_to_vmem [thread:$0]  %s16, 2048, %s121, [#allocation12], 64, 64, 4
    $region69: #{tpu_custom_call.1} parent=1 // pred_fallthru
      _
    // Predicated region
    $region70: #{tpu_custom_call.1} parent=1 // pred_check
      _
    $region71: #{tpu_custom_call.1} parent=1 // pred_check_branch
      %128 = sbr.rel (0) target = $region73
    $region72: #{tpu_custom_call.1} parent=1 // pred_region
      _
    $region73: #{tpu_custom_call.1} parent=1 // pred_fallthru
      _
    // Predicated region
    $region74: #{tpu_custom_call.1} parent=1 // pred_check
      _
    $region75: #{tpu_custom_call.1} parent=1 // pred_check_branch
      %130 = sbr.rel (0) target = $region77
    $region76: #{tpu_custom_call.1} parent=1 // pred_region
      _
    $region77: #{tpu_custom_call.1} parent=1 // pred_fallthru
      _
    // Predicated region
    $region78: #{tpu_custom_call.1} parent=1 // pred_check
      _
    $region79: #{tpu_custom_call.1} parent=1 // pred_check_branch
      %132 = sbr.rel (0) target = $region81
    $region80: #{tpu_custom_call.1} parent=1 // pred_region
      _
    $region81: #{tpu_custom_call.1} parent=1 // pred_fallthru
      _
    // Predicated region
    $region82: #{tpu_custom_call.1} parent=1 // pred_check
      _
    $region83: #{tpu_custom_call.1} parent=1 // pred_check_branch
      %134 = sbr.rel (0) target = $region85
    $region84: #{tpu_custom_call.1} parent=1 // pred_region
      %135 = dma.done [#allocation3], 128
    $region85: #{tpu_custom_call.1} parent=1 // pred_fallthru
      _
    // Predicated region
    $region86: #{tpu_custom_call.1} parent=1 // pred_check
      _
    $region87: #{tpu_custom_call.1} parent=1 // pred_check_branch
      %137 = sbr.rel (0) target = $region89
    $region88: #{tpu_custom_call.1} parent=1 // pred_region
      %138 = dma.done [#allocation6], 2048
    $region89: #{tpu_custom_call.1} parent=1 // pred_fallthru
      _
    // Predicated region
    $region90: #{tpu_custom_call.1} parent=1 // pred_check
      _
    $region91: #{tpu_custom_call.1} parent=1 // pred_check_branch
      %140 = sbr.rel (0) target = $region93
    $region92: #{tpu_custom_call.1} parent=1 // pred_region
      %141 = dma.done [#allocation6], 4096
    $region93: #{tpu_custom_call.1} parent=1 // pred_fallthru
      _
    // Predicated region
    $region94: #{tpu_custom_call.1} parent=1 // pred_check
      _
    $region95: #{tpu_custom_call.1} parent=1 // pred_check_branch
      %143 = sbr.rel (0) target = $region97
    $region96: #{tpu_custom_call.1} parent=1 // pred_region
      %144 = dma.done [#allocation9], 2048
    $region97: #{tpu_custom_call.1} parent=1 // pred_fallthru
      _
    // Predicated region
    $region98: #{tpu_custom_call.1} parent=1 // pred_check
      _
    $region99: #{tpu_custom_call.1} parent=1 // pred_check_branch
      %146 = sbr.rel (0) target = $region101
    $region100: #{tpu_custom_call.1} parent=1 // pred_region
      %147 = dma.done [#allocation9], 2048
    $region101: #{tpu_custom_call.1} parent=1 // pred_fallthru
      _
    // Predicated region
    $region102: #{tpu_custom_call.1} parent=1 // pred_check
      _
    $region103: #{tpu_custom_call.1} parent=1 // pred_check_branch
      %149 = sbr.rel (0) target = $region105
    $region104: #{tpu_custom_call.1} parent=1 // pred_region
      %150 = dma.done [#allocation12], 2048
    $region105: #{tpu_custom_call.1} parent=1 // pred_fallthru
      _
    %v152 = vld [vmem:[%s0] sm:$0xf]
    %v153 = vld [vmem:[%s0 + $0x4] sm:$0xf]
    %v154 = vunpack.c.l.bf16 %v152
    %v155 = vunpack.c.l.bf16 %v153
    %v156 = vld [vmem:[%s1] sm:$0xff]
    %v157 = vld [vmem:[%s1 + $0x8] sm:$0xff]
    %159 = vset.pattern.permute.xlu0 0
    %160 = vperm.xlu0 %159, %v156
    %v161 = vpop.permute.xlu0 %160
    %164 = vset.pattern.permute.xlu0 0
    %165 = vperm.xlu0 %164, %v157
    %v166 = vpop.permute.xlu0 %165
    %v168 = vmul.f32 %v154, %v161
    %v169 = vmul.f32 %v155, %v166
    %v170 = vlaneseq
    %v171 = vshrl.u32 %v170, 7
    %v172 = vlaneseq
    %v173 = vand.u32 %v172, 127
    %vm174 = vcmp.le.s32.totalorder %v173, %v171
    %v175 = vld [vmem:[%s4] sm:$0x1]
    %v176 = vld [vmem:[%s5] sm:$0x1]
    %177 = vadd.xlane.f32.xlu0 %v168
    %v178 = vpop.xlane.xlu0 %177
    %179 = vadd.xlane.f32.xlu0 %v169
    %v180 = vpop.xlane.xlu0 %179
    %v181 = vmul.f32 %v178, 0.03125
    %v182 = vmul.f32 %v180, 0.03125
    %v183 = vmul.f32 %v168, %v168
    %v184 = vmul.f32 %v169, %v169
    %185 = vadd.xlane.f32.xlu0 %v183
    %v186 = vpop.xlane.xlu0 %185
    %187 = vadd.xlane.f32.xlu0 %v184
    %v188 = vpop.xlane.xlu0 %187
    %v189 = vmul.f32 %v186, 0.03125
    %v190 = vmul.f32 %v188, 0.03125
    %v191 = vmul.f32 %v181, %v181
    %v192 = vmul.f32 %v182, %v182
    %v193 = vsub.f32 %v189, %v191
    %v194 = vsub.f32 %v190, %v192
    %v195 = vmax.f32 %v193, 0.0
    %v196 = vmax.f32 %v194, 0.0
    %v197 = vsub.f32 %v168, %v181
    %v198 = vsub.f32 %v169, %v182
    %v199 = vadd.f32 %v195, 1e-08
    %v200 = vadd.f32 %v196, 1e-08
    %v201 = vrsqrt.pop %v199
    %v202 = vrsqrt.pop %v200
    %v203 = vmul.f32 %v197, %v201
    %v204 = vmul.f32 %v198, %v202
    %v205 = vlaneseq
    %v206 = vshrl.u32 %v205, 7
    %v207 = vsub.s32 0, %v206
    %v208 = vrot.slane %v175, %v207
    %v209 = vmul.f32 %v203, %v208
    %v210 = vmul.f32 %v204, %v208
    %v211 = vlaneseq
    %v212 = vshrl.u32 %v211, 7
    %v213 = vsub.s32 0, %v212
    %v214 = vrot.slane %v176, %v213
    %v215 = vadd.f32 %v209, %v214
    %v216 = vadd.f32 %v210, %v214
    %v217 = vpack.c.bf16 %v216, %v215
    %v218 = vpack.c.bf16 %v169, %v168
    %v219 = vld [vmem:[#allocation5] sm:$0xf]
    %v220 = vld [vmem:[#allocation5 + $0x4] sm:$0xf]
    %v221 = vld [vmem:[#allocation5 + $0x8] sm:$0xf]
    %v222 = vld [vmem:[#allocation5 + $0xc] sm:$0xf]
    %v223 = vld [vmem:[#allocation5 + $0x10] sm:$0xf]
    %v224 = vld [vmem:[#allocation5 + $0x14] sm:$0xf]
    %v225 = vld [vmem:[#allocation5 + $0x18] sm:$0xf]
    %v226 = vld [vmem:[#allocation5 + $0x1c] sm:$0xf]
    %v227 = vld [vmem:[#allocation5 + $0x20] sm:$0xf]
    %v228 = vld [vmem:[#allocation5 + $0x24] sm:$0xf]
    %v229 = vld [vmem:[#allocation5 + $0x28] sm:$0xf]
    %v230 = vld [vmem:[#allocation5 + $0x2c] sm:$0xf]
    %v231 = vld [vmem:[#allocation5 + $0x30] sm:$0xf]
    %v232 = vld [vmem:[#allocation5 + $0x34] sm:$0xf]
    %v233 = vld [vmem:[#allocation5 + $0x38] sm:$0xf]
    %v234 = vld [vmem:[#allocation5 + $0x3c] sm:$0xf]
    %v235 = vld [vmem:[%s8] sm:$0x1]
    %v236 = vlaneseq
    %v237 = vshrl.u32 %v236, 7
    %v238 = vsub.s32 0, %v237
    %v239 = vrot.slane %v235, %v238
    %v256 = vunpack.c.l.b16 %v219
    %v257 = vunpack.c.l.b16 %v220
    %v258 = vunpack.c.l.b16 %v221
    %v259 = vunpack.c.l.b16 %v222
    %v260 = vunpack.c.l.b16 %v223
    %v261 = vunpack.c.l.b16 %v224
    %v262 = vunpack.c.l.b16 %v225
    %v263 = vunpack.c.l.b16 %v226
    %v264 = vunpack.c.l.b16 %v227
    %v265 = vunpack.c.l.b16 %v228
    %v266 = vunpack.c.l.b16 %v229
    %v267 = vunpack.c.l.b16 %v230
    %v268 = vunpack.c.l.b16 %v231
    %v269 = vunpack.c.l.b16 %v232
    %v270 = vunpack.c.l.b16 %v233
    %v271 = vunpack.c.l.b16 %v234
    %v272 = vpack.c.b16 %v257, %v256
    %v273 = vpack.c.b16 %v259, %v258
    %v274 = vpack.c.b16 %v261, %v260
    %v275 = vpack.c.b16 %v263, %v262
    %v276 = vpack.c.b16 %v265, %v264
    %v277 = vpack.c.b16 %v267, %v266
    %v278 = vpack.c.b16 %v269, %v268
    %v279 = vpack.c.b16 %v271, %v270
    %288 = vmatprep.subr.bf16.mxu0 0
    %289 = vmatpush1.bf16.msra.mxu0 %v279
    %290 = vmatprep.subr.bf16.mxu0 0
    %291 = vmatpush1.bf16.msra.mxu0 %v278
    %292 = vmatprep.subr.bf16.mxu0 0
    %293 = vmatpush1.bf16.msra.mxu0 %v277
    %294 = vmatprep.subr.bf16.mxu0 0
    %295 = vmatpush1.bf16.msra.mxu0 %v276
    %296 = vmatprep.subr.bf16.mxu0 0
    %297 = vmatpush1.bf16.msra.mxu0 %v275
    %298 = vmatprep.subr.bf16.mxu0 0
    %299 = vmatpush1.bf16.msra.mxu0 %v274
    %300 = vmatprep.subr.bf16.mxu0 0
    %301 = vmatpush1.bf16.msra.mxu0 %v273
    %302 = vmatprep.subr.bf16.mxu0 0
    %303 = vmatpush1.bf16.msra.mxu0 %v272
    %304 = vmatprep.subr.bf16.mxu0 0
    %305 = vmatpush2.bf16.msra.mxu0 0
    %306 = vmatprep.subr.bf16.mxu0 0
    %307 = vmatpush2.bf16.msra.mxu0 0
    %308 = vmatprep.subr.bf16.mxu0 0
    %309 = vmatpush2.bf16.msra.mxu0 0
    %310 = vmatprep.subr.bf16.mxu0 0
    %311 = vmatpush2.bf16.msra.mxu0 0
    %312 = vmatprep.subr.bf16.mxu0 0
    %313 = vmatpush2.bf16.msra.mxu0 0
    %314 = vmatprep.subr.bf16.mxu0 0
    %315 = vmatpush2.bf16.msra.mxu0 0
    %316 = vmatprep.subr.bf16.mxu0 0
    %317 = vmatpush2.bf16.msra.mxu0 0
    %318 = vmatprep.subr.bf16.mxu0 0
    %319 = vmatpush2.bf16.msra.mxu0 0
    %320 = vmatprep.mubr.bf16.mxu0 0
    %321 = vmatmul.mubr.bf16.gmra.mxu0 %v217
    %v322 = vpop.f32.mrf.mxu0
    %v323 = vadd.f32 %v239, %v322
    %v324 = vpop.f32.mrf.mxu0
    %v325 = vpop.f32.mrf.mxu0
    %v326 = vadd.f32 %v239, %v325
    %v327 = vpop.f32.mrf.mxu0
    %328 = vdwg.mxu0
    %v329 = vld [vmem:[#allocation7] sm:$0xff]
    %v330 = vld [vmem:[#allocation7 + $0x8] sm:$0xff]
    %v331 = vld [vmem:[#allocation7 + $0x10] sm:$0xff]
    %v332 = vld [vmem:[#allocation7 + $0x18] sm:$0xff]
    %v333 = vld [vmem:[#allocation7 + $0x20] sm:$0xff]
    %v334 = vld [vmem:[#allocation7 + $0x28] sm:$0xff]
    %v335 = vld [vmem:[#allocation7 + $0x30] sm:$0xff]
    %v336 = vld [vmem:[#allocation7 + $0x38] sm:$0xff]
    %v337 = vld [vmem:[#allocation7 + $0x40] sm:$0xff]
    %v338 = vld [vmem:[#allocation7 + $0x48] sm:$0xff]
    %v339 = vld [vmem:[#allocation7 + $0x50] sm:$0xff]
    %v340 = vld [vmem:[#allocation7 + $0x58] sm:$0xff]
    %v341 = vld [vmem:[#allocation7 + $0x60] sm:$0xff]
    %v342 = vld [vmem:[#allocation7 + $0x68] sm:$0xff]
    %v343 = vld [vmem:[#allocation7 + $0x70] sm:$0xff]
    %v344 = vld [vmem:[#allocation7 + $0x78] sm:$0xff]
    %v345 = vld [vmem:[%s9] ss:$2 sm:$0x3]
    %v347 = vlaneseq
    %v348 = vshrl.u32 %v347, 7
    %v349 = vsub.s32 0, %v348
    %v350 = vrot.slane %v345, %v349
    %v351 = vlaneseq
    %v352 = vshrl.u32 %v351, 7
    %v353 = vsub.s32 1, %v352
    %v354 = vrot.slane %v345, %v353
    %v373 = vunpack.c.l.b16 %v329
    %v374 = vunpack.c.h.b16 %v329
    %v375 = vunpack.c.l.b16 %v330
    %v376 = vunpack.c.h.b16 %v330
    %v377 = vunpack.c.l.b16 %v331
    %v378 = vunpack.c.h.b16 %v331
    %v379 = vunpack.c.l.b16 %v332
    %v380 = vunpack.c.h.b16 %v332
    %v381 = vunpack.c.l.b16 %v333
    %v382 = vunpack.c.h.b16 %v333
    %v383 = vunpack.c.l.b16 %v334
    %v384 = vunpack.c.h.b16 %v334
    %v385 = vunpack.c.l.b16 %v335
    %v386 = vunpack.c.h.b16 %v335
    %v387 = vunpack.c.l.b16 %v336
    %v388 = vunpack.c.h.b16 %v336
    %v389 = vunpack.c.l.b16 %v337
    %v390 = vunpack.c.h.b16 %v337
    %v391 = vunpack.c.l.b16 %v338
    %v392 = vunpack.c.h.b16 %v338
    %v393 = vunpack.c.l.b16 %v339
    %v394 = vunpack.c.h.b16 %v339
    %v395 = vunpack.c.l.b16 %v340
    %v396 = vunpack.c.h.b16 %v340
    %v397 = vunpack.c.l.b16 %v341
    %v398 = vunpack.c.h.b16 %v341
    %v399 = vunpack.c.l.b16 %v342
    %v400 = vunpack.c.h.b16 %v342
    %v401 = vunpack.c.l.b16 %v343
    %v402 = vunpack.c.h.b16 %v343
    %v403 = vunpack.c.l.b16 %v344
    %v404 = vunpack.c.h.b16 %v344
    %v405 = vpack.c.b16 %v375, %v373
    %v406 = vpack.c.b16 %v376, %v374
    %v407 = vpack.c.b16 %v379, %v377
    %v408 = vpack.c.b16 %v380, %v378
    %v409 = vpack.c.b16 %v383, %v381
    %v410 = vpack.c.b16 %v384, %v382
    %v411 = vpack.c.b16 %v387, %v385
    %v412 = vpack.c.b16 %v388, %v386
    %v413 = vpack.c.b16 %v391, %v389
    %v414 = vpack.c.b16 %v392, %v390
    %v415 = vpack.c.b16 %v395, %v393
    %v416 = vpack.c.b16 %v396, %v394
    %v417 = vpack.c.b16 %v399, %v397
    %v418 = vpack.c.b16 %v400, %v398
    %v419 = vpack.c.b16 %v403, %v401
    %v420 = vpack.c.b16 %v404, %v402
    %437 = vmatprep.subr.bf16.mxu0 %v420
    %438 = vmatpush1.bf16.msra.mxu0 %v419
    %439 = vmatprep.subr.bf16.mxu0 %v418
    %440 = vmatpush1.bf16.msra.mxu0 %v417
    %441 = vmatprep.subr.bf16.mxu0 %v416
    %442 = vmatpush1.bf16.msra.mxu0 %v415
    %443 = vmatprep.subr.bf16.mxu0 %v414
    %444 = vmatpush1.bf16.msra.mxu0 %v413
    %445 = vmatprep.subr.bf16.mxu0 %v412
    %446 = vmatpush1.bf16.msra.mxu0 %v411
    %447 = vmatprep.subr.bf16.mxu0 %v410
    %448 = vmatpush1.bf16.msra.mxu0 %v409
    %449 = vmatprep.subr.bf16.mxu0 %v408
    %450 = vmatpush1.bf16.msra.mxu0 %v407
    %451 = vmatprep.subr.bf16.mxu0 %v406
    %452 = vmatpush1.bf16.msra.mxu0 %v405
    %453 = vmatprep.subr.bf16.mxu0 0
    %454 = vmatpush2.bf16.msra.mxu0 0
    %455 = vmatprep.subr.bf16.mxu0 0
    %456 = vmatpush2.bf16.msra.mxu0 0
    %457 = vmatprep.subr.bf16.mxu0 0
    %458 = vmatpush2.bf16.msra.mxu0 0
    %459 = vmatprep.subr.bf16.mxu0 0
    %460 = vmatpush2.bf16.msra.mxu0 0
    %461 = vmatprep.subr.bf16.mxu0 0
    %462 = vmatpush2.bf16.msra.mxu0 0
    %463 = vmatprep.subr.bf16.mxu0 0
    %464 = vmatpush2.bf16.msra.mxu0 0
    %465 = vmatprep.subr.bf16.mxu0 0
    %466 = vmatpush2.bf16.msra.mxu0 0
    %467 = vmatprep.subr.bf16.mxu0 0
    %468 = vmatpush2.bf16.msra.mxu0 0
    %469 = vmatprep.mubr.bf16.mxu0 0
    %470 = vmatmul.mubr.bf16.gmra.mxu0 %v218
    %v471 = vpop.f32.mrf.mxu0
    %v472 = vadd.f32 %v350, %v471
    %v473 = vpop.f32.mrf.mxu0
    %v474 = vadd.f32 %v354, %v473
    %v475 = vpop.f32.mrf.mxu0
    %v476 = vadd.f32 %v350, %v475
    %v477 = vpop.f32.mrf.mxu0
    %v478 = vadd.f32 %v354, %v477
    %479 = vdwg.mxu0
    %v480 = vpack.c.bf16 %v323, %v323
    %v481 = vpack.c.bf16 %v326, %v326
    %v482 = vpack.c.bf16 %v472, %v472
    %v483 = vpack.c.bf16 %v476, %v476
    %v484 = vpack.c.bf16 %v474, %v474
    %v485 = vpack.c.bf16 %v478, %v478
    %486 = vmatprep.subr.bf16.mxu0 0
    %487 = vmatpush1.bf16.xpose.msra.mxu0 0
    %488 = vmatprep.subr.bf16.mxu0 0
    %489 = vmatpush1.bf16.xpose.msra.mxu0 0
    %490 = vmatprep.subr.bf16.mxu0 0
    %491 = vmatpush1.bf16.xpose.msra.mxu0 0
    %492 = vmatprep.subr.bf16.mxu0 0
    %493 = vmatpush1.bf16.xpose.msra.mxu0 0
    %494 = vmatprep.subr.bf16.mxu0 0
    %495 = vmatpush1.bf16.xpose.msra.mxu0 0
    %496 = vmatprep.subr.bf16.mxu0 0
    %497 = vmatpush1.bf16.xpose.msra.mxu0 0
    %498 = vmatprep.subr.bf16.mxu0 0
    %499 = vmatpush1.bf16.xpose.msra.mxu0 0
    %500 = vmatprep.subr.bf16.mxu0 0
    %501 = vmatpush1.bf16.xpose.msra.mxu0 %v482
    %502 = vmatprep.subr.bf16.mxu0 0
    %503 = vmatpush2.bf16.xpose.msra.mxu0 0
    %504 = vmatprep.subr.bf16.mxu0 0
    %505 = vmatpush2.bf16.xpose.msra.mxu0 0
    %506 = vmatprep.subr.bf16.mxu0 0
    %507 = vmatpush2.bf16.xpose.msra.mxu0 0
    %508 = vmatprep.subr.bf16.mxu0 0
    %509 = vmatpush2.bf16.xpose.msra.mxu0 0
    %510 = vmatprep.subr.bf16.mxu0 0
    %511 = vmatpush2.bf16.xpose.msra.mxu0 0
    %512 = vmatprep.subr.bf16.mxu0 0
    %513 = vmatpush2.bf16.xpose.msra.mxu0 0
    %514 = vmatprep.subr.bf16.mxu0 0
    %515 = vmatpush2.bf16.xpose.msra.mxu0 0
    %516 = vmatprep.subr.bf16.mxu0 0
    %517 = vmatpush2.bf16.xpose.msra.mxu0 0
    %518 = vmatprep.mubr.bf16.mxu0 0
    %519 = vmatmul.mubr.bf16.gmra.mxu0 %v480
    %v520 = vpop.f32.mrf.mxu0
    %v521 = vadd.f32 0.0, %v520
    %v522 = vpop.f32.mrf.mxu0
    %v523 = vpop.f32.mrf.mxu0
    %v524 = vpop.f32.mrf.mxu0
    %525 = vdwg.mxu0
    %526 = vmatprep.subr.bf16.mxu0 0
    %527 = vmatpush1.bf16.xpose.msra.mxu0 0
    %528 = vmatprep.subr.bf16.mxu0 0
    %529 = vmatpush1.bf16.xpose.msra.mxu0 0
    %530 = vmatprep.subr.bf16.mxu0 0
    %531 = vmatpush1.bf16.xpose.msra.mxu0 0
    %532 = vmatprep.subr.bf16.mxu0 0
    %533 = vmatpush1.bf16.xpose.msra.mxu0 0
    %534 = vmatprep.subr.bf16.mxu0 0
    %535 = vmatpush1.bf16.xpose.msra.mxu0 0
    %536 = vmatprep.subr.bf16.mxu0 0
    %537 = vmatpush1.bf16.xpose.msra.mxu0 0
    %538 = vmatprep.subr.bf16.mxu0 0
    %539 = vmatpush1.bf16.xpose.msra.mxu0 0
    %540 = vmatprep.subr.bf16.mxu0 0
    %541 = vmatpush1.bf16.xpose.msra.mxu0 %v483
    %542 = vmatprep.subr.bf16.mxu0 0
    %543 = vmatpush2.bf16.xpose.msra.mxu0 0
    %544 = vmatprep.subr.bf16.mxu0 0
    %545 = vmatpush2.bf16.xpose.msra.mxu0 0
    %546 = vmatprep.subr.bf16.mxu0 0
    %547 = vmatpush2.bf16.xpose.msra.mxu0 0
    %548 = vmatprep.subr.bf16.mxu0 0
    %549 = vmatpush2.bf16.xpose.msra.mxu0 0
    %550 = vmatprep.subr.bf16.mxu0 0
    %551 = vmatpush2.bf16.xpose.msra.mxu0 0
    %552 = vmatprep.subr.bf16.mxu0 0
    %553 = vmatpush2.bf16.xpose.msra.mxu0 0
    %554 = vmatprep.subr.bf16.mxu0 0
    %555 = vmatpush2.bf16.xpose.msra.mxu0 0
    %556 = vmatprep.subr.bf16.mxu0 0
    %557 = vmatpush2.bf16.xpose.msra.mxu0 0
    %558 = vmatprep.mubr.bf16.mxu0 0
    %559 = vmatmul.mubr.bf16.gmra.mxu0 %v481
    %v560 = vpop.f32.mrf.mxu0
    %v561 = vadd.f32 0.0, %v560
    %v562 = vpop.f32.mrf.mxu0
    %v563 = vpop.f32.mrf.mxu0
    %v564 = vpop.f32.mrf.mxu0
    %565 = vdwg.mxu0
    %v566 = vsel %vm174, 1, 0
    %vm567 = vcmp.eq.s32.totalorder %v566, 1
    %v568 = vsel %vm567, %v521, -1e+30
    %v569 = vsel %vm567, %v561, -1e+30
    %vm570 = vcmask 64512
    %v571 = vsel %vm570, %v568, -inf
    %572 = vmax.xlane.f32.xlu0 %v571
    %v573 = vpop.xlane.xlu0 %572
    %v574 = vsel %vm570, %v569, -inf
    %575 = vmax.xlane.f32.xlu0 %v574
    %v576 = vpop.xlane.xlu0 %575
    %v577 = vsub.f32 %v568, %v573
    %v578 = vsub.f32 %v569, %v576
    %v579 = vmul.f32 %v577, 1.442695
    %v580 = vpow.pop %v579
    %v581 = vmul.f32 %v578, 1.442695
    %v582 = vpow.pop %v581
    %v583 = vsel %vm570, %v580, 0.0
    %584 = vadd.xlane.f32.xlu0 %v583
    %v585 = vpop.xlane.xlu0 %584
    %v586 = vsel %vm570, %v582, 0.0
    %587 = vadd.xlane.f32.xlu0 %v586
    %v588 = vpop.xlane.xlu0 %587
    %v589 = vrcp.pop %v585
    %v590 = vrcp.pop %v588
    %v591 = vmul.f32 %v580, %v589
    %v592 = vmul.f32 %v582, %v590
    %v593 = vpack.c.bf16 %v591, %v591
    %v594 = vpack.c.bf16 %v592, %v592
    %v596 = vsel %vm570, %v593, 0
    %vm598 = vcmask 1043456
    %v600 = vsel %vm598, %v484, 0
    %602 = vmatprep.subr.bf16.mxu0 0
    %603 = vmatpush1.bf16.msra.mxu0 0
    %604 = vmatprep.subr.bf16.mxu0 0
    %605 = vmatpush1.bf16.msra.mxu0 0
    %606 = vmatprep.subr.bf16.mxu0 0
    %607 = vmatpush1.bf16.msra.mxu0 0
    %608 = vmatprep.subr.bf16.mxu0 0
    %609 = vmatpush1.bf16.msra.mxu0 0
    %610 = vmatprep.subr.bf16.mxu0 0
    %611 = vmatpush1.bf16.msra.mxu0 0
    %612 = vmatprep.subr.bf16.mxu0 0
    %613 = vmatpush1.bf16.msra.mxu0 0
    %614 = vmatprep.subr.bf16.mxu0 0
    %615 = vmatpush1.bf16.msra.mxu0 0
    %616 = vmatprep.subr.bf16.mxu0 0
    %617 = vmatpush1.bf16.msra.mxu0 %v600
    %618 = vmatprep.subr.bf16.mxu0 0
    %619 = vmatpush2.bf16.msra.mxu0 0
    %620 = vmatprep.subr.bf16.mxu0 0
    %621 = vmatpush2.bf16.msra.mxu0 0
    %622 = vmatprep.subr.bf16.mxu0 0
    %623 = vmatpush2.bf16.msra.mxu0 0
    %624 = vmatprep.subr.bf16.mxu0 0
    %625 = vmatpush2.bf16.msra.mxu0 0
    %626 = vmatprep.subr.bf16.mxu0 0
    %627 = vmatpush2.bf16.msra.mxu0 0
    %628 = vmatprep.subr.bf16.mxu0 0
    %629 = vmatpush2.bf16.msra.mxu0 0
    %630 = vmatprep.subr.bf16.mxu0 0
    %631 = vmatpush2.bf16.msra.mxu0 0
    %632 = vmatprep.subr.bf16.mxu0 0
    %633 = vmatpush2.bf16.msra.mxu0 0
    %634 = vmatprep.mubr.bf16.mxu0 0
    %635 = vmatmul.mubr.bf16.gmra.mxu0 %v596
    %v636 = vpop.f32.mrf.mxu0
    %v637 = vadd.f32 0.0, %v636
    %v638 = vpop.f32.mrf.mxu0
    %v639 = vpop.f32.mrf.mxu0
    %v640 = vpop.f32.mrf.mxu0
    %641 = vdwg.mxu0
    %v643 = vsel %vm570, %v594, 0
    %v646 = vsel %vm598, %v485, 0
    %648 = vmatprep.subr.bf16.mxu0 0
    %649 = vmatpush1.bf16.msra.mxu0 0
    %650 = vmatprep.subr.bf16.mxu0 0
    %651 = vmatpush1.bf16.msra.mxu0 0
    %652 = vmatprep.subr.bf16.mxu0 0
    %653 = vmatpush1.bf16.msra.mxu0 0
    %654 = vmatprep.subr.bf16.mxu0 0
    %655 = vmatpush1.bf16.msra.mxu0 0
    %656 = vmatprep.subr.bf16.mxu0 0
    %657 = vmatpush1.bf16.msra.mxu0 0
    %658 = vmatprep.subr.bf16.mxu0 0
    %659 = vmatpush1.bf16.msra.mxu0 0
    %660 = vmatprep.subr.bf16.mxu0 0
    %661 = vmatpush1.bf16.msra.mxu0 0
    %662 = vmatprep.subr.bf16.mxu0 0
    %663 = vmatpush1.bf16.msra.mxu0 %v646
    %664 = vmatprep.subr.bf16.mxu0 0
    %665 = vmatpush2.bf16.msra.mxu0 0
    %666 = vmatprep.subr.bf16.mxu0 0
    %667 = vmatpush2.bf16.msra.mxu0 0
    %668 = vmatprep.subr.bf16.mxu0 0
    %669 = vmatpush2.bf16.msra.mxu0 0
    %670 = vmatprep.subr.bf16.mxu0 0
    %671 = vmatpush2.bf16.msra.mxu0 0
    %672 = vmatprep.subr.bf16.mxu0 0
    %673 = vmatpush2.bf16.msra.mxu0 0
    %674 = vmatprep.subr.bf16.mxu0 0
    %675 = vmatpush2.bf16.msra.mxu0 0
    %676 = vmatprep.subr.bf16.mxu0 0
    %677 = vmatpush2.bf16.msra.mxu0 0
    %678 = vmatprep.subr.bf16.mxu0 0
    %679 = vmatpush2.bf16.msra.mxu0 0
    %680 = vmatprep.mubr.bf16.mxu0 0
    %681 = vmatmul.mubr.bf16.gmra.mxu0 %v643
    %v682 = vpop.f32.mrf.mxu0
    %v683 = vadd.f32 0.0, %v682
    %v684 = vpop.f32.mrf.mxu0
    %v685 = vpop.f32.mrf.mxu0
    %v686 = vpop.f32.mrf.mxu0
    %687 = vdwg.mxu0
    %v688 = vpack.c.bf16 %v683, %v637
    %v689 = vld [vmem:[#allocation8] sm:$0xf]
    %v690 = vld [vmem:[#allocation8 + $0x4] sm:$0xf]
    %v691 = vld [vmem:[#allocation8 + $0x8] sm:$0xf]
    %v692 = vld [vmem:[#allocation8 + $0xc] sm:$0xf]
    %v693 = vld [vmem:[#allocation8 + $0x10] sm:$0xf]
    %v694 = vld [vmem:[#allocation8 + $0x14] sm:$0xf]
    %v695 = vld [vmem:[#allocation8 + $0x18] sm:$0xf]
    %v696 = vld [vmem:[#allocation8 + $0x1c] sm:$0xf]
    %v697 = vld [vmem:[#allocation8 + $0x20] sm:$0xf]
    %v698 = vld [vmem:[#allocation8 + $0x24] sm:$0xf]
    %v699 = vld [vmem:[#allocation8 + $0x28] sm:$0xf]
    %v700 = vld [vmem:[#allocation8 + $0x2c] sm:$0xf]
    %v701 = vld [vmem:[#allocation8 + $0x30] sm:$0xf]
    %v702 = vld [vmem:[#allocation8 + $0x34] sm:$0xf]
    %v703 = vld [vmem:[#allocation8 + $0x38] sm:$0xf]
    %v704 = vld [vmem:[#allocation8 + $0x3c] sm:$0xf]
    %v705 = vld [vmem:[%s11] sm:$0x1]
    %v706 = vlaneseq
    %v707 = vshrl.u32 %v706, 7
    %v708 = vsub.s32 0, %v707
    %v709 = vrot.slane %v705, %v708
    %v726 = vunpack.c.l.b16 %v689
    %v727 = vunpack.c.l.b16 %v690
    %v728 = vunpack.c.l.b16 %v691
    %v729 = vunpack.c.l.b16 %v692
    %v730 = vunpack.c.l.b16 %v693
    %v731 = vunpack.c.l.b16 %v694
    %v732 = vunpack.c.l.b16 %v695
    %v733 = vunpack.c.l.b16 %v696
    %v734 = vunpack.c.l.b16 %v697
    %v735 = vunpack.c.l.b16 %v698
    %v736 = vunpack.c.l.b16 %v699
    %v737 = vunpack.c.l.b16 %v700
    %v738 = vunpack.c.l.b16 %v701
    %v739 = vunpack.c.l.b16 %v702
    %v740 = vunpack.c.l.b16 %v703
    %v741 = vunpack.c.l.b16 %v704
    %v742 = vpack.c.b16 %v727, %v726
    %v743 = vpack.c.b16 %v729, %v728
    %v744 = vpack.c.b16 %v731, %v730
    %v745 = vpack.c.b16 %v733, %v732
    %v746 = vpack.c.b16 %v735, %v734
    %v747 = vpack.c.b16 %v737, %v736
    %v748 = vpack.c.b16 %v739, %v738
    %v749 = vpack.c.b16 %v741, %v740
    %758 = vmatprep.subr.bf16.mxu0 0
    %759 = vmatpush1.bf16.msra.mxu0 %v749
    %760 = vmatprep.subr.bf16.mxu0 0
    %761 = vmatpush1.bf16.msra.mxu0 %v748
    %762 = vmatprep.subr.bf16.mxu0 0
    %763 = vmatpush1.bf16.msra.mxu0 %v747
    %764 = vmatprep.subr.bf16.mxu0 0
    %765 = vmatpush1.bf16.msra.mxu0 %v746
    %766 = vmatprep.subr.bf16.mxu0 0
    %767 = vmatpush1.bf16.msra.mxu0 %v745
    %768 = vmatprep.subr.bf16.mxu0 0
    %769 = vmatpush1.bf16.msra.mxu0 %v744
    %770 = vmatprep.subr.bf16.mxu0 0
    %771 = vmatpush1.bf16.msra.mxu0 %v743
    %772 = vmatprep.subr.bf16.mxu0 0
    %773 = vmatpush1.bf16.msra.mxu0 %v742
    %774 = vmatprep.subr.bf16.mxu0 0
    %775 = vmatpush2.bf16.msra.mxu0 0
    %776 = vmatprep.subr.bf16.mxu0 0
    %777 = vmatpush2.bf16.msra.mxu0 0
    %778 = vmatprep.subr.bf16.mxu0 0
    %779 = vmatpush2.bf16.msra.mxu0 0
    %780 = vmatprep.subr.bf16.mxu0 0
    %781 = vmatpush2.bf16.msra.mxu0 0
    %782 = vmatprep.subr.bf16.mxu0 0
    %783 = vmatpush2.bf16.msra.mxu0 0
    %784 = vmatprep.subr.bf16.mxu0 0
    %785 = vmatpush2.bf16.msra.mxu0 0
    %786 = vmatprep.subr.bf16.mxu0 0
    %787 = vmatpush2.bf16.msra.mxu0 0
    %788 = vmatprep.subr.bf16.mxu0 0
    %789 = vmatpush2.bf16.msra.mxu0 0
    %790 = vmatprep.mubr.bf16.mxu0 0
    %791 = vmatmul.mubr.bf16.gmra.mxu0 %v688
    %v792 = vpop.f32.mrf.mxu0
    %v793 = vadd.f32 %v709, %v792
    %v794 = vpop.f32.mrf.mxu0
    %v795 = vpop.f32.mrf.mxu0
    %v796 = vadd.f32 %v709, %v795
    %v797 = vpop.f32.mrf.mxu0
    %798 = vdwg.mxu0
    %v799 = vadd.f32 %v215, %v793
    %v800 = vadd.f32 %v216, %v796
    %v801 = vld [vmem:[%s12] sm:$0x1]
    %v802 = vld [vmem:[%s13] sm:$0x1]
    %803 = vadd.xlane.f32.xlu0 %v799
    %v804 = vpop.xlane.xlu0 %803
    %805 = vadd.xlane.f32.xlu0 %v800
    %v806 = vpop.xlane.xlu0 %805
    %v807 = vmul.f32 %v804, 0.03125
    %v808 = vmul.f32 %v806, 0.03125
    %v809 = vmul.f32 %v799, %v799
    %v810 = vmul.f32 %v800, %v800
    %811 = vadd.xlane.f32.xlu0 %v809
    %v812 = vpop.xlane.xlu0 %811
    %813 = vadd.xlane.f32.xlu0 %v810
    %v814 = vpop.xlane.xlu0 %813
    %v815 = vmul.f32 %v812, 0.03125
    %v816 = vmul.f32 %v814, 0.03125
    %v817 = vmul.f32 %v807, %v807
    %v818 = vmul.f32 %v808, %v808
    %v819 = vsub.f32 %v815, %v817
    %v820 = vsub.f32 %v816, %v818
    %v821 = vmax.f32 %v819, 0.0
    %v822 = vmax.f32 %v820, 0.0
    %v823 = vsub.f32 %v799, %v807
    %v824 = vsub.f32 %v800, %v808
    %v825 = vadd.f32 %v821, 1e-08
    %v826 = vadd.f32 %v822, 1e-08
    %v827 = vrsqrt.pop %v825
    %v828 = vrsqrt.pop %v826
    %v829 = vmul.f32 %v823, %v827
    %v830 = vmul.f32 %v824, %v828
    %v831 = vlaneseq
    %v832 = vshrl.u32 %v831, 7
    %v833 = vsub.s32 0, %v832
    %v834 = vrot.slane %v801, %v833
    %v835 = vmul.f32 %v829, %v834
    %v836 = vmul.f32 %v830, %v834
    %v837 = vlaneseq
    %v838 = vshrl.u32 %v837, 7
    %v839 = vsub.s32 0, %v838
    %v840 = vrot.slane %v802, %v839
    %v841 = vadd.f32 %v835, %v840
    %v842 = vadd.f32 %v836, %v840
    %v843 = vpack.c.bf16 %v842, %v841
    %v844 = vld [vmem:[#allocation10] sm:$0xf]
    %v845 = vld [vmem:[#allocation10 + $0x4] sm:$0xf]
    %v846 = vld [vmem:[#allocation10 + $0x8] sm:$0xf]
    %v847 = vld [vmem:[#allocation10 + $0xc] sm:$0xf]
    %v848 = vld [vmem:[#allocation10 + $0x10] sm:$0xf]
    %v849 = vld [vmem:[#allocation10 + $0x14] sm:$0xf]
    %v850 = vld [vmem:[#allocation10 + $0x18] sm:$0xf]
    %v851 = vld [vmem:[#allocation10 + $0x1c] sm:$0xf]
    %v852 = vld [vmem:[#allocation10 + $0x20] sm:$0xf]
    %v853 = vld [vmem:[#allocation10 + $0x24] sm:$0xf]
    %v854 = vld [vmem:[#allocation10 + $0x28] sm:$0xf]
    %v855 = vld [vmem:[#allocation10 + $0x2c] sm:$0xf]
    %v856 = vld [vmem:[#allocation10 + $0x30] sm:$0xf]
    %v857 = vld [vmem:[#allocation10 + $0x34] sm:$0xf]
    %v858 = vld [vmem:[#allocation10 + $0x38] sm:$0xf]
    %v859 = vld [vmem:[#allocation10 + $0x3c] sm:$0xf]
    %v860 = vld [vmem:[%s15] sm:$0x1]
    %v861 = vlaneseq
    %v862 = vshrl.u32 %v861, 7
    %v863 = vsub.s32 0, %v862
    %v864 = vrot.slane %v860, %v863
    %v881 = vunpack.c.l.b16 %v844
    %v882 = vunpack.c.l.b16 %v845
    %v883 = vunpack.c.l.b16 %v846
    %v884 = vunpack.c.l.b16 %v847
    %v885 = vunpack.c.l.b16 %v848
    %v886 = vunpack.c.l.b16 %v849
    %v887 = vunpack.c.l.b16 %v850
    %v888 = vunpack.c.l.b16 %v851
    %v889 = vunpack.c.l.b16 %v852
    %v890 = vunpack.c.l.b16 %v853
    %v891 = vunpack.c.l.b16 %v854
    %v892 = vunpack.c.l.b16 %v855
    %v893 = vunpack.c.l.b16 %v856
    %v894 = vunpack.c.l.b16 %v857
    %v895 = vunpack.c.l.b16 %v858
    %v896 = vunpack.c.l.b16 %v859
    %v897 = vpack.c.b16 %v882, %v881
    %v898 = vpack.c.b16 %v884, %v883
    %v899 = vpack.c.b16 %v886, %v885
    %v900 = vpack.c.b16 %v888, %v887
    %v901 = vpack.c.b16 %v890, %v889
    %v902 = vpack.c.b16 %v892, %v891
    %v903 = vpack.c.b16 %v894, %v893
    %v904 = vpack.c.b16 %v896, %v895
    %913 = vmatprep.subr.bf16.mxu0 0
    %914 = vmatpush1.bf16.msra.mxu0 %v904
    %915 = vmatprep.subr.bf16.mxu0 0
    %916 = vmatpush1.bf16.msra.mxu0 %v903
    %917 = vmatprep.subr.bf16.mxu0 0
    %918 = vmatpush1.bf16.msra.mxu0 %v902
    %919 = vmatprep.subr.bf16.mxu0 0
    %920 = vmatpush1.bf16.msra.mxu0 %v901
    %921 = vmatprep.subr.bf16.mxu0 0
    %922 = vmatpush1.bf16.msra.mxu0 %v900
    %923 = vmatprep.subr.bf16.mxu0 0
    %924 = vmatpush1.bf16.msra.mxu0 %v899
    %925 = vmatprep.subr.bf16.mxu0 0
    %926 = vmatpush1.bf16.msra.mxu0 %v898
    %927 = vmatprep.subr.bf16.mxu0 0
    %928 = vmatpush1.bf16.msra.mxu0 %v897
    %929 = vmatprep.subr.bf16.mxu0 0
    %930 = vmatpush2.bf16.msra.mxu0 0
    %931 = vmatprep.subr.bf16.mxu0 0
    %932 = vmatpush2.bf16.msra.mxu0 0
    %933 = vmatprep.subr.bf16.mxu0 0
    %934 = vmatpush2.bf16.msra.mxu0 0
    %935 = vmatprep.subr.bf16.mxu0 0
    %936 = vmatpush2.bf16.msra.mxu0 0
    %937 = vmatprep.subr.bf16.mxu0 0
    %938 = vmatpush2.bf16.msra.mxu0 0
    %939 = vmatprep.subr.bf16.mxu0 0
    %940 = vmatpush2.bf16.msra.mxu0 0
    %941 = vmatprep.subr.bf16.mxu0 0
    %942 = vmatpush2.bf16.msra.mxu0 0
    %943 = vmatprep.subr.bf16.mxu0 0
    %944 = vmatpush2.bf16.msra.mxu0 0
    %945 = vmatprep.mubr.bf16.mxu0 0
    %946 = vmatmul.mubr.bf16.gmra.mxu0 %v843
    %v947 = vpop.f32.mrf.mxu0
    %v948 = vadd.f32 %v864, %v947
    %v949 = vpop.f32.mrf.mxu0
    %v950 = vpop.f32.mrf.mxu0
    %v951 = vadd.f32 %v864, %v950
    %v952 = vpop.f32.mrf.mxu0
    %953 = vdwg.mxu0
    %v954 = vmax.f32 %v948, 0.0
    %v955 = vmax.f32 %v951, 0.0
    %v956 = vpack.c.bf16 %v955, %v954
    %v957 = vld [vmem:[#allocation11] sm:$0xf]
    %v958 = vld [vmem:[#allocation11 + $0x4] sm:$0xf]
    %v959 = vld [vmem:[#allocation11 + $0x8] sm:$0xf]
    %v960 = vld [vmem:[#allocation11 + $0xc] sm:$0xf]
    %v961 = vld [vmem:[#allocation11 + $0x10] sm:$0xf]
    %v962 = vld [vmem:[#allocation11 + $0x14] sm:$0xf]
    %v963 = vld [vmem:[#allocation11 + $0x18] sm:$0xf]
    %v964 = vld [vmem:[#allocation11 + $0x1c] sm:$0xf]
    %v965 = vld [vmem:[#allocation11 + $0x20] sm:$0xf]
    %v966 = vld [vmem:[#allocation11 + $0x24] sm:$0xf]
    %v967 = vld [vmem:[#allocation11 + $0x28] sm:$0xf]
    %v968 = vld [vmem:[#allocation11 + $0x2c] sm:$0xf]
    %v969 = vld [vmem:[#allocation11 + $0x30] sm:$0xf]
    %v970 = vld [vmem:[#allocation11 + $0x34] sm:$0xf]
    %v971 = vld [vmem:[#allocation11 + $0x38] sm:$0xf]
    %v972 = vld [vmem:[#allocation11 + $0x3c] sm:$0xf]
    %v973 = vld [vmem:[%s17] sm:$0x1]
    %v974 = vlaneseq
    %v975 = vshrl.u32 %v974, 7
    %v976 = vsub.s32 0, %v975
    %v977 = vrot.slane %v973, %v976
    %v994 = vunpack.c.l.b16 %v957
    %v995 = vunpack.c.l.b16 %v958
    %v996 = vunpack.c.l.b16 %v959
    %v997 = vunpack.c.l.b16 %v960
    %v998 = vunpack.c.l.b16 %v961
    %v999 = vunpack.c.l.b16 %v962
    %v1000 = vunpack.c.l.b16 %v963
    %v1001 = vunpack.c.l.b16 %v964
    %v1002 = vunpack.c.l.b16 %v965
    %v1003 = vunpack.c.l.b16 %v966
    %v1004 = vunpack.c.l.b16 %v967
    %v1005 = vunpack.c.l.b16 %v968
    %v1006 = vunpack.c.l.b16 %v969
    %v1007 = vunpack.c.l.b16 %v970
    %v1008 = vunpack.c.l.b16 %v971
    %v1009 = vunpack.c.l.b16 %v972
    %v1010 = vpack.c.b16 %v995, %v994
    %v1011 = vpack.c.b16 %v997, %v996
    %v1012 = vpack.c.b16 %v999, %v998
    %v1013 = vpack.c.b16 %v1001, %v1000
    %v1014 = vpack.c.b16 %v1003, %v1002
    %v1015 = vpack.c.b16 %v1005, %v1004
    %v1016 = vpack.c.b16 %v1007, %v1006
    %v1017 = vpack.c.b16 %v1009, %v1008
    %1026 = vmatprep.subr.bf16.mxu0 0
    %1027 = vmatpush1.bf16.msra.mxu0 %v1017
    %1028 = vmatprep.subr.bf16.mxu0 0
    %1029 = vmatpush1.bf16.msra.mxu0 %v1016
    %1030 = vmatprep.subr.bf16.mxu0 0
    %1031 = vmatpush1.bf16.msra.mxu0 %v1015
    %1032 = vmatprep.subr.bf16.mxu0 0
    %1033 = vmatpush1.bf16.msra.mxu0 %v1014
    %1034 = vmatprep.subr.bf16.mxu0 0
    %1035 = vmatpush1.bf16.msra.mxu0 %v1013
    %1036 = vmatprep.subr.bf16.mxu0 0
    %1037 = vmatpush1.bf16.msra.mxu0 %v1012
    %1038 = vmatprep.subr.bf16.mxu0 0
    %1039 = vmatpush1.bf16.msra.mxu0 %v1011
    %1040 = vmatprep.subr.bf16.mxu0 0
    %1041 = vmatpush1.bf16.msra.mxu0 %v1010
    %1042 = vmatprep.subr.bf16.mxu0 0
    %1043 = vmatpush2.bf16.msra.mxu0 0
    %1044 = vmatprep.subr.bf16.mxu0 0
    %1045 = vmatpush2.bf16.msra.mxu0 0
    %1046 = vmatprep.subr.bf16.mxu0 0
    %1047 = vmatpush2.bf16.msra.mxu0 0
    %1048 = vmatprep.subr.bf16.mxu0 0
    %1049 = vmatpush2.bf16.msra.mxu0 0
    %1050 = vmatprep.subr.bf16.mxu0 0
    %1051 = vmatpush2.bf16.msra.mxu0 0
    %1052 = vmatprep.subr.bf16.mxu0 0
    %1053 = vmatpush2.bf16.msra.mxu0 0
    %1054 = vmatprep.subr.bf16.mxu0 0
    %1055 = vmatpush2.bf16.msra.mxu0 0
    %1056 = vmatprep.subr.bf16.mxu0 0
    %1057 = vmatpush2.bf16.msra.mxu0 0
    %1058 = vmatprep.mubr.bf16.mxu0 0
    %1059 = vmatmul.mubr.bf16.gmra.mxu0 %v956
    %v1060 = vpop.f32.mrf.mxu0
    %v1061 = vadd.f32 %v977, %v1060
    %v1062 = vpop.f32.mrf.mxu0
    %v1063 = vpop.f32.mrf.mxu0
    %v1064 = vadd.f32 %v977, %v1063
    %v1065 = vpop.f32.mrf.mxu0
    %1066 = vdwg.mxu0
    %v1067 = vadd.f32 %v1061, %v841
    %v1068 = vadd.f32 %v1064, %v842
    %v1069 = vmul.f32 %v1067, %v161
    %v1070 = vmul.f32 %v1068, %v166
    %v1071 = vld [vmem:[%s4 + $0x1] sm:$0x1]
    %v1072 = vld [vmem:[%s5 + $0x1] sm:$0x1]
    %1073 = vadd.xlane.f32.xlu0 %v1069
    %v1074 = vpop.xlane.xlu0 %1073
    %1075 = vadd.xlane.f32.xlu0 %v1070
    %v1076 = vpop.xlane.xlu0 %1075
    %v1077 = vmul.f32 %v1074, 0.03125
    %v1078 = vmul.f32 %v1076, 0.03125
    %v1079 = vmul.f32 %v1069, %v1069
    %v1080 = vmul.f32 %v1070, %v1070
    %1081 = vadd.xlane.f32.xlu0 %v1079
    %v1082 = vpop.xlane.xlu0 %1081
    %1083 = vadd.xlane.f32.xlu0 %v1080
    %v1084 = vpop.xlane.xlu0 %1083
    %v1085 = vmul.f32 %v1082, 0.03125
    %v1086 = vmul.f32 %v1084, 0.03125
    %v1087 = vmul.f32 %v1077, %v1077
    %v1088 = vmul.f32 %v1078, %v1078
    %v1089 = vsub.f32 %v1085, %v1087
    %v1090 = vsub.f32 %v1086, %v1088
    %v1091 = vmax.f32 %v1089, 0.0
    %v1092 = vmax.f32 %v1090, 0.0
    %v1093 = vsub.f32 %v1069, %v1077
    %v1094 = vsub.f32 %v1070, %v1078
    %v1095 = vadd.f32 %v1091, 1e-08
    %v1096 = vadd.f32 %v1092, 1e-08
    %v1097 = vrsqrt.pop %v1095
    %v1098 = vrsqrt.pop %v1096
    %v1099 = vmul.f32 %v1093, %v1097
    %v1100 = vmul.f32 %v1094, %v1098
    %v1101 = vlaneseq
    %v1102 = vshrl.u32 %v1101, 7
    %v1103 = vsub.s32 0, %v1102
    %v1104 = vrot.slane %v1071, %v1103
    %v1105 = vmul.f32 %v1099, %v1104
    %v1106 = vmul.f32 %v1100, %v1104
    %v1107 = vlaneseq
    %v1108 = vshrl.u32 %v1107, 7
    %v1109 = vsub.s32 0, %v1108
    %v1110 = vrot.slane %v1072, %v1109
    %v1111 = vadd.f32 %v1105, %v1110
    %v1112 = vadd.f32 %v1106, %v1110
    %v1113 = vpack.c.bf16 %v1112, %v1111
    %v1114 = vpack.c.bf16 %v1070, %v1069
    %s1115 = scalar_lea.vmem [#allocation5], 64
    %v1116 = vld [vmem:[%s1115] sm:$0xf]
    %v1117 = vld [vmem:[%s1115 + $0x4] sm:$0xf]
    %v1118 = vld [vmem:[%s1115 + $0x8] sm:$0xf]
    %v1119 = vld [vmem:[%s1115 + $0xc] sm:$0xf]
    %v1120 = vld [vmem:[%s1115 + $0x10] sm:$0xf]
    %v1121 = vld [vmem:[%s1115 + $0x14] sm:$0xf]
    %v1122 = vld [vmem:[%s1115 + $0x18] sm:$0xf]
    %v1123 = vld [vmem:[%s1115 + $0x1c] sm:$0xf]
    %v1124 = vld [vmem:[%s1115 + $0x20] sm:$0xf]
    %v1125 = vld [vmem:[%s1115 + $0x24] sm:$0xf]
    %v1126 = vld [vmem:[%s1115 + $0x28] sm:$0xf]
    %v1127 = vld [vmem:[%s1115 + $0x2c] sm:$0xf]
    %v1128 = vld [vmem:[%s1115 + $0x30] sm:$0xf]
    %v1129 = vld [vmem:[%s1115 + $0x34] sm:$0xf]
    %v1130 = vld [vmem:[%s1115 + $0x38] sm:$0xf]
    %v1131 = vld [vmem:[%s1115 + $0x3c] sm:$0xf]
    %v1132 = vld [vmem:[%s8 + $0x1] sm:$0x1]
    %v1133 = vlaneseq
    %v1134 = vshrl.u32 %v1133, 7
    %v1135 = vsub.s32 0, %v1134
    %v1136 = vrot.slane %v1132, %v1135
    %v1153 = vunpack.c.l.b16 %v1116
    %v1154 = vunpack.c.l.b16 %v1117
    %v1155 = vunpack.c.l.b16 %v1118
    %v1156 = vunpack.c.l.b16 %v1119
    %v1157 = vunpack.c.l.b16 %v1120
    %v1158 = vunpack.c.l.b16 %v1121
    %v1159 = vunpack.c.l.b16 %v1122
    %v1160 = vunpack.c.l.b16 %v1123
    %v1161 = vunpack.c.l.b16 %v1124
    %v1162 = vunpack.c.l.b16 %v1125
    %v1163 = vunpack.c.l.b16 %v1126
    %v1164 = vunpack.c.l.b16 %v1127
    %v1165 = vunpack.c.l.b16 %v1128
    %v1166 = vunpack.c.l.b16 %v1129
    %v1167 = vunpack.c.l.b16 %v1130
    %v1168 = vunpack.c.l.b16 %v1131
    %v1169 = vpack.c.b16 %v1154, %v1153
    %v1170 = vpack.c.b16 %v1156, %v1155
    %v1171 = vpack.c.b16 %v1158, %v1157
    %v1172 = vpack.c.b16 %v1160, %v1159
    %v1173 = vpack.c.b16 %v1162, %v1161
    %v1174 = vpack.c.b16 %v1164, %v1163
    %v1175 = vpack.c.b16 %v1166, %v1165
    %v1176 = vpack.c.b16 %v1168, %v1167
    %1185 = vmatprep.subr.bf16.mxu0 0
    %1186 = vmatpush1.bf16.msra.mxu0 %v1176
    %1187 = vmatprep.subr.bf16.mxu0 0
    %1188 = vmatpush1.bf16.msra.mxu0 %v1175
    %1189 = vmatprep.subr.bf16.mxu0 0
    %1190 = vmatpush1.bf16.msra.mxu0 %v1174
    %1191 = vmatprep.subr.bf16.mxu0 0
    %1192 = vmatpush1.bf16.msra.mxu0 %v1173
    %1193 = vmatprep.subr.bf16.mxu0 0
    %1194 = vmatpush1.bf16.msra.mxu0 %v1172
    %1195 = vmatprep.subr.bf16.mxu0 0
    %1196 = vmatpush1.bf16.msra.mxu0 %v1171
    %1197 = vmatprep.subr.bf16.mxu0 0
    %1198 = vmatpush1.bf16.msra.mxu0 %v1170
    %1199 = vmatprep.subr.bf16.mxu0 0
    %1200 = vmatpush1.bf16.msra.mxu0 %v1169
    %1201 = vmatprep.subr.bf16.mxu0 0
    %1202 = vmatpush2.bf16.msra.mxu0 0
    %1203 = vmatprep.subr.bf16.mxu0 0
    %1204 = vmatpush2.bf16.msra.mxu0 0
    %1205 = vmatprep.subr.bf16.mxu0 0
    %1206 = vmatpush2.bf16.msra.mxu0 0
    %1207 = vmatprep.subr.bf16.mxu0 0
    %1208 = vmatpush2.bf16.msra.mxu0 0
    %1209 = vmatprep.subr.bf16.mxu0 0
    %1210 = vmatpush2.bf16.msra.mxu0 0
    %1211 = vmatprep.subr.bf16.mxu0 0
    %1212 = vmatpush2.bf16.msra.mxu0 0
    %1213 = vmatprep.subr.bf16.mxu0 0
    %1214 = vmatpush2.bf16.msra.mxu0 0
    %1215 = vmatprep.subr.bf16.mxu0 0
    %1216 = vmatpush2.bf16.msra.mxu0 0
    %1217 = vmatprep.mubr.bf16.mxu0 0
    %1218 = vmatmul.mubr.bf16.gmra.mxu0 %v1113
    %v1219 = vpop.f32.mrf.mxu0
    %v1220 = vadd.f32 %v1136, %v1219
    %v1221 = vpop.f32.mrf.mxu0
    %v1222 = vpop.f32.mrf.mxu0
    %v1223 = vadd.f32 %v1136, %v1222
    %v1224 = vpop.f32.mrf.mxu0
    %1225 = vdwg.mxu0
    %s1226 = scalar_lea.vmem [#allocation7], 128
    %v1227 = vld [vmem:[%s1226] sm:$0xff]
    %v1228 = vld [vmem:[%s1226 + $0x8] sm:$0xff]
    %v1229 = vld [vmem:[%s1226 + $0x10] sm:$0xff]
    %v1230 = vld [vmem:[%s1226 + $0x18] sm:$0xff]
    %v1231 = vld [vmem:[%s1226 + $0x20] sm:$0xff]
    %v1232 = vld [vmem:[%s1226 + $0x28] sm:$0xff]
    %v1233 = vld [vmem:[%s1226 + $0x30] sm:$0xff]
    %v1234 = vld [vmem:[%s1226 + $0x38] sm:$0xff]
    %v1235 = vld [vmem:[%s1226 + $0x40] sm:$0xff]
    %v1236 = vld [vmem:[%s1226 + $0x48] sm:$0xff]
    %v1237 = vld [vmem:[%s1226 + $0x50] sm:$0xff]
    %v1238 = vld [vmem:[%s1226 + $0x58] sm:$0xff]
    %v1239 = vld [vmem:[%s1226 + $0x60] sm:$0xff]
    %v1240 = vld [vmem:[%s1226 + $0x68] sm:$0xff]
    %v1241 = vld [vmem:[%s1226 + $0x70] sm:$0xff]
    %v1242 = vld [vmem:[%s1226 + $0x78] sm:$0xff]
    %s1243 = scalar_lea.vmem %s9, 1
    %v1244 = vld [vmem:[%s1243] ss:$2 sm:$0x3]
    %v1246 = vlaneseq
    %v1247 = vshrl.u32 %v1246, 7
    %v1248 = vsub.s32 0, %v1247
    %v1249 = vrot.slane %v1244, %v1248
    %v1250 = vlaneseq
    %v1251 = vshrl.u32 %v1250, 7
    %v1252 = vsub.s32 1, %v1251
    %v1253 = vrot.slane %v1244, %v1252
    %v1272 = vunpack.c.l.b16 %v1227
    %v1273 = vunpack.c.h.b16 %v1227
    %v1274 = vunpack.c.l.b16 %v1228
    %v1275 = vunpack.c.h.b16 %v1228
    %v1276 = vunpack.c.l.b16 %v1229
    %v1277 = vunpack.c.h.b16 %v1229
    %v1278 = vunpack.c.l.b16 %v1230
    %v1279 = vunpack.c.h.b16 %v1230
    %v1280 = vunpack.c.l.b16 %v1231
    %v1281 = vunpack.c.h.b16 %v1231
    %v1282 = vunpack.c.l.b16 %v1232
    %v1283 = vunpack.c.h.b16 %v1232
    %v1284 = vunpack.c.l.b16 %v1233
    %v1285 = vunpack.c.h.b16 %v1233
    %v1286 = vunpack.c.l.b16 %v1234
    %v1287 = vunpack.c.h.b16 %v1234
    %v1288 = vunpack.c.l.b16 %v1235
    %v1289 = vunpack.c.h.b16 %v1235
    %v1290 = vunpack.c.l.b16 %v1236
    %v1291 = vunpack.c.h.b16 %v1236
    %v1292 = vunpack.c.l.b16 %v1237
    %v1293 = vunpack.c.h.b16 %v1237
    %v1294 = vunpack.c.l.b16 %v1238
    %v1295 = vunpack.c.h.b16 %v1238
    %v1296 = vunpack.c.l.b16 %v1239
    %v1297 = vunpack.c.h.b16 %v1239
    %v1298 = vunpack.c.l.b16 %v1240
    %v1299 = vunpack.c.h.b16 %v1240
    %v1300 = vunpack.c.l.b16 %v1241
    %v1301 = vunpack.c.h.b16 %v1241
    %v1302 = vunpack.c.l.b16 %v1242
    %v1303 = vunpack.c.h.b16 %v1242
    %v1304 = vpack.c.b16 %v1274, %v1272
    %v1305 = vpack.c.b16 %v1275, %v1273
    %v1306 = vpack.c.b16 %v1278, %v1276
    %v1307 = vpack.c.b16 %v1279, %v1277
    %v1308 = vpack.c.b16 %v1282, %v1280
    %v1309 = vpack.c.b16 %v1283, %v1281
    %v1310 = vpack.c.b16 %v1286, %v1284
    %v1311 = vpack.c.b16 %v1287, %v1285
    %v1312 = vpack.c.b16 %v1290, %v1288
    %v1313 = vpack.c.b16 %v1291, %v1289
    %v1314 = vpack.c.b16 %v1294, %v1292
    %v1315 = vpack.c.b16 %v1295, %v1293
    %v1316 = vpack.c.b16 %v1298, %v1296
    %v1317 = vpack.c.b16 %v1299, %v1297
    %v1318 = vpack.c.b16 %v1302, %v1300
    %v1319 = vpack.c.b16 %v1303, %v1301
    %1336 = vmatprep.subr.bf16.mxu0 %v1319
    %1337 = vmatpush1.bf16.msra.mxu0 %v1318
    %1338 = vmatprep.subr.bf16.mxu0 %v1317
    %1339 = vmatpush1.bf16.msra.mxu0 %v1316
    %1340 = vmatprep.subr.bf16.mxu0 %v1315
    %1341 = vmatpush1.bf16.msra.mxu0 %v1314
    %1342 = vmatprep.subr.bf16.mxu0 %v1313
    %1343 = vmatpush1.bf16.msra.mxu0 %v1312
    %1344 = vmatprep.subr.bf16.mxu0 %v1311
    %1345 = vmatpush1.bf16.msra.mxu0 %v1310
    %1346 = vmatprep.subr.bf16.mxu0 %v1309
    %1347 = vmatpush1.bf16.msra.mxu0 %v1308
    %1348 = vmatprep.subr.bf16.mxu0 %v1307
    %1349 = vmatpush1.bf16.msra.mxu0 %v1306
    %1350 = vmatprep.subr.bf16.mxu0 %v1305
    %1351 = vmatpush1.bf16.msra.mxu0 %v1304
    %1352 = vmatprep.subr.bf16.mxu0 0
    %1353 = vmatpush2.bf16.msra.mxu0 0
    %1354 = vmatprep.subr.bf16.mxu0 0
    %1355 = vmatpush2.bf16.msra.mxu0 0
    %1356 = vmatprep.subr.bf16.mxu0 0
    %1357 = vmatpush2.bf16.msra.mxu0 0
    %1358 = vmatprep.subr.bf16.mxu0 0
    %1359 = vmatpush2.bf16.msra.mxu0 0
    %1360 = vmatprep.subr.bf16.mxu0 0
    %1361 = vmatpush2.bf16.msra.mxu0 0
    %1362 = vmatprep.subr.bf16.mxu0 0
    %1363 = vmatpush2.bf16.msra.mxu0 0
    %1364 = vmatprep.subr.bf16.mxu0 0
    %1365 = vmatpush2.bf16.msra.mxu0 0
    %1366 = vmatprep.subr.bf16.mxu0 0
    %1367 = vmatpush2.bf16.msra.mxu0 0
    %1368 = vmatprep.mubr.bf16.mxu0 0
    %1369 = vmatmul.mubr.bf16.gmra.mxu0 %v1114
    %v1370 = vpop.f32.mrf.mxu0
    %v1371 = vadd.f32 %v1249, %v1370
    %v1372 = vpop.f32.mrf.mxu0
    %v1373 = vadd.f32 %v1253, %v1372
    %v1374 = vpop.f32.mrf.mxu0
    %v1375 = vadd.f32 %v1249, %v1374
    %v1376 = vpop.f32.mrf.mxu0
    %v1377 = vadd.f32 %v1253, %v1376
    %1378 = vdwg.mxu0
    %v1379 = vpack.c.bf16 %v1220, %v1220
    %v1380 = vpack.c.bf16 %v1223, %v1223
    %v1381 = vpack.c.bf16 %v1371, %v1371
    %v1382 = vpack.c.bf16 %v1375, %v1375
    %v1383 = vpack.c.bf16 %v1373, %v1373
    %v1384 = vpack.c.bf16 %v1377, %v1377
    %1385 = vmatprep.subr.bf16.mxu0 0
    %1386 = vmatpush1.bf16.xpose.msra.mxu0 0
    %1387 = vmatprep.subr.bf16.mxu0 0
    %1388 = vmatpush1.bf16.xpose.msra.mxu0 0
    %1389 = vmatprep.subr.bf16.mxu0 0
    %1390 = vmatpush1.bf16.xpose.msra.mxu0 0
    %1391 = vmatprep.subr.bf16.mxu0 0
    %1392 = vmatpush1.bf16.xpose.msra.mxu0 0
    %1393 = vmatprep.subr.bf16.mxu0 0
    %1394 = vmatpush1.bf16.xpose.msra.mxu0 0
    %1395 = vmatprep.subr.bf16.mxu0 0
    %1396 = vmatpush1.bf16.xpose.msra.mxu0 0
    %1397 = vmatprep.subr.bf16.mxu0 0
    %1398 = vmatpush1.bf16.xpose.msra.mxu0 0
    %1399 = vmatprep.subr.bf16.mxu0 0
    %1400 = vmatpush1.bf16.xpose.msra.mxu0 %v1381
    %1401 = vmatprep.subr.bf16.mxu0 0
    %1402 = vmatpush2.bf16.xpose.msra.mxu0 0
    %1403 = vmatprep.subr.bf16.mxu0 0
    %1404 = vmatpush2.bf16.xpose.msra.mxu0 0
    %1405 = vmatprep.subr.bf16.mxu0 0
    %1406 = vmatpush2.bf16.xpose.msra.mxu0 0
    %1407 = vmatprep.subr.bf16.mxu0 0
    %1408 = vmatpush2.bf16.xpose.msra.mxu0 0
    %1409 = vmatprep.subr.bf16.mxu0 0
    %1410 = vmatpush2.bf16.xpose.msra.mxu0 0
    %1411 = vmatprep.subr.bf16.mxu0 0
    %1412 = vmatpush2.bf16.xpose.msra.mxu0 0
    %1413 = vmatprep.subr.bf16.mxu0 0
    %1414 = vmatpush2.bf16.xpose.msra.mxu0 0
    %1415 = vmatprep.subr.bf16.mxu0 0
    %1416 = vmatpush2.bf16.xpose.msra.mxu0 0
    %1417 = vmatprep.mubr.bf16.mxu0 0
    %1418 = vmatmul.mubr.bf16.gmra.mxu0 %v1379
    %v1419 = vpop.f32.mrf.mxu0
    %v1420 = vadd.f32 0.0, %v1419
    %v1421 = vpop.f32.mrf.mxu0
    %v1422 = vpop.f32.mrf.mxu0
    %v1423 = vpop.f32.mrf.mxu0
    %1424 = vdwg.mxu0
    %1425 = vmatprep.subr.bf16.mxu0 0
    %1426 = vmatpush1.bf16.xpose.msra.mxu0 0
    %1427 = vmatprep.subr.bf16.mxu0 0
    %1428 = vmatpush1.bf16.xpose.msra.mxu0 0
    %1429 = vmatprep.subr.bf16.mxu0 0
    %1430 = vmatpush1.bf16.xpose.msra.mxu0 0
    %1431 = vmatprep.subr.bf16.mxu0 0
    %1432 = vmatpush1.bf16.xpose.msra.mxu0 0
    %1433 = vmatprep.subr.bf16.mxu0 0
    %1434 = vmatpush1.bf16.xpose.msra.mxu0 0
    %1435 = vmatprep.subr.bf16.mxu0 0
    %1436 = vmatpush1.bf16.xpose.msra.mxu0 0
    %1437 = vmatprep.subr.bf16.mxu0 0
    %1438 = vmatpush1.bf16.xpose.msra.mxu0 0
    %1439 = vmatprep.subr.bf16.mxu0 0
    %1440 = vmatpush1.bf16.xpose.msra.mxu0 %v1382
    %1441 = vmatprep.subr.bf16.mxu0 0
    %1442 = vmatpush2.bf16.xpose.msra.mxu0 0
    %1443 = vmatprep.subr.bf16.mxu0 0
    %1444 = vmatpush2.bf16.xpose.msra.mxu0 0
    %1445 = vmatprep.subr.bf16.mxu0 0
    %1446 = vmatpush2.bf16.xpose.msra.mxu0 0
    %1447 = vmatprep.subr.bf16.mxu0 0
    %1448 = vmatpush2.bf16.xpose.msra.mxu0 0
    %1449 = vmatprep.subr.bf16.mxu0 0
    %1450 = vmatpush2.bf16.xpose.msra.mxu0 0
    %1451 = vmatprep.subr.bf16.mxu0 0
    %1452 = vmatpush2.bf16.xpose.msra.mxu0 0
    %1453 = vmatprep.subr.bf16.mxu0 0
    %1454 = vmatpush2.bf16.xpose.msra.mxu0 0
    %1455 = vmatprep.subr.bf16.mxu0 0
    %1456 = vmatpush2.bf16.xpose.msra.mxu0 0
    %1457 = vmatprep.mubr.bf16.mxu0 0
    %1458 = vmatmul.mubr.bf16.gmra.mxu0 %v1380
    %v1459 = vpop.f32.mrf.mxu0
    %v1460 = vadd.f32 0.0, %v1459
    %v1461 = vpop.f32.mrf.mxu0
    %v1462 = vpop.f32.mrf.mxu0
    %v1463 = vpop.f32.mrf.mxu0
    %1464 = vdwg.mxu0
    %v1465 = vsel %vm567, %v1420, -1e+30
    %v1466 = vsel %vm567, %v1460, -1e+30
    %v1467 = vsel %vm570, %v1465, -inf
    %1468 = vmax.xlane.f32.xlu0 %v1467
    %v1469 = vpop.xlane.xlu0 %1468
    %v1470 = vsel %vm570, %v1466, -inf
    %1471 = vmax.xlane.f32.xlu0 %v1470
    %v1472 = vpop.xlane.xlu0 %1471
    %v1473 = vsub.f32 %v1465, %v1469
    %v1474 = vsub.f32 %v1466, %v1472
    %v1475 = vmul.f32 %v1473, 1.442695
    %v1476 = vpow.pop %v1475
    %v1477 = vmul.f32 %v1474, 1.442695
    %v1478 = vpow.pop %v1477
    %v1479 = vsel %vm570, %v1476, 0.0
    %1480 = vadd.xlane.f32.xlu0 %v1479
    %v1481 = vpop.xlane.xlu0 %1480
    %v1482 = vsel %vm570, %v1478, 0.0
    %1483 = vadd.xlane.f32.xlu0 %v1482
    %v1484 = vpop.xlane.xlu0 %1483
    %v1485 = vrcp.pop %v1481
    %v1486 = vrcp.pop %v1484
    %v1487 = vmul.f32 %v1476, %v1485
    %v1488 = vmul.f32 %v1478, %v1486
    %v1489 = vpack.c.bf16 %v1487, %v1487
    %v1490 = vpack.c.bf16 %v1488, %v1488
    %v1492 = vsel %vm570, %v1489, 0
    %v1495 = vsel %vm598, %v1383, 0
    %1497 = vmatprep.subr.bf16.mxu0 0
    %1498 = vmatpush1.bf16.msra.mxu0 0
    %1499 = vmatprep.subr.bf16.mxu0 0
    %1500 = vmatpush1.bf16.msra.mxu0 0
    %1501 = vmatprep.subr.bf16.mxu0 0
    %1502 = vmatpush1.bf16.msra.mxu0 0
    %1503 = vmatprep.subr.bf16.mxu0 0
    %1504 = vmatpush1.bf16.msra.mxu0 0
    %1505 = vmatprep.subr.bf16.mxu0 0
    %1506 = vmatpush1.bf16.msra.mxu0 0
    %1507 = vmatprep.subr.bf16.mxu0 0
    %1508 = vmatpush1.bf16.msra.mxu0 0
    %1509 = vmatprep.subr.bf16.mxu0 0
    %1510 = vmatpush1.bf16.msra.mxu0 0
    %1511 = vmatprep.subr.bf16.mxu0 0
    %1512 = vmatpush1.bf16.msra.mxu0 %v1495
    %1513 = vmatprep.subr.bf16.mxu0 0
    %1514 = vmatpush2.bf16.msra.mxu0 0
    %1515 = vmatprep.subr.bf16.mxu0 0
    %1516 = vmatpush2.bf16.msra.mxu0 0
    %1517 = vmatprep.subr.bf16.mxu0 0
    %1518 = vmatpush2.bf16.msra.mxu0 0
    %1519 = vmatprep.subr.bf16.mxu0 0
    %1520 = vmatpush2.bf16.msra.mxu0 0
    %1521 = vmatprep.subr.bf16.mxu0 0
    %1522 = vmatpush2.bf16.msra.mxu0 0
    %1523 = vmatprep.subr.bf16.mxu0 0
    %1524 = vmatpush2.bf16.msra.mxu0 0
    %1525 = vmatprep.subr.bf16.mxu0 0
    %1526 = vmatpush2.bf16.msra.mxu0 0
    %1527 = vmatprep.subr.bf16.mxu0 0
    %1528 = vmatpush2.bf16.msra.mxu0 0
    %1529 = vmatprep.mubr.bf16.mxu0 0
    %1530 = vmatmul.mubr.bf16.gmra.mxu0 %v1492
    %v1531 = vpop.f32.mrf.mxu0
    %v1532 = vadd.f32 0.0, %v1531
    %v1533 = vpop.f32.mrf.mxu0
    %v1534 = vpop.f32.mrf.mxu0
    %v1535 = vpop.f32.mrf.mxu0
    %1536 = vdwg.mxu0
    %v1538 = vsel %vm570, %v1490, 0
    %v1541 = vsel %vm598, %v1384, 0
    %1543 = vmatprep.subr.bf16.mxu0 0
    %1544 = vmatpush1.bf16.msra.mxu0 0
    %1545 = vmatprep.subr.bf16.mxu0 0
    %1546 = vmatpush1.bf16.msra.mxu0 0
    %1547 = vmatprep.subr.bf16.mxu0 0
    %1548 = vmatpush1.bf16.msra.mxu0 0
    %1549 = vmatprep.subr.bf16.mxu0 0
    %1550 = vmatpush1.bf16.msra.mxu0 0
    %1551 = vmatprep.subr.bf16.mxu0 0
    %1552 = vmatpush1.bf16.msra.mxu0 0
    %1553 = vmatprep.subr.bf16.mxu0 0
    %1554 = vmatpush1.bf16.msra.mxu0 0
    %1555 = vmatprep.subr.bf16.mxu0 0
    %1556 = vmatpush1.bf16.msra.mxu0 0
    %1557 = vmatprep.subr.bf16.mxu0 0
    %1558 = vmatpush1.bf16.msra.mxu0 %v1541
    %1559 = vmatprep.subr.bf16.mxu0 0
    %1560 = vmatpush2.bf16.msra.mxu0 0
    %1561 = vmatprep.subr.bf16.mxu0 0
    %1562 = vmatpush2.bf16.msra.mxu0 0
    %1563 = vmatprep.subr.bf16.mxu0 0
    %1564 = vmatpush2.bf16.msra.mxu0 0
    %1565 = vmatprep.subr.bf16.mxu0 0
    %1566 = vmatpush2.bf16.msra.mxu0 0
    %1567 = vmatprep.subr.bf16.mxu0 0
    %1568 = vmatpush2.bf16.msra.mxu0 0
    %1569 = vmatprep.subr.bf16.mxu0 0
    %1570 = vmatpush2.bf16.msra.mxu0 0
    %1571 = vmatprep.subr.bf16.mxu0 0
    %1572 = vmatpush2.bf16.msra.mxu0 0
    %1573 = vmatprep.subr.bf16.mxu0 0
    %1574 = vmatpush2.bf16.msra.mxu0 0
    %1575 = vmatprep.mubr.bf16.mxu0 0
    %1576 = vmatmul.mubr.bf16.gmra.mxu0 %v1538
    %v1577 = vpop.f32.mrf.mxu0
    %v1578 = vadd.f32 0.0, %v1577
    %v1579 = vpop.f32.mrf.mxu0
    %v1580 = vpop.f32.mrf.mxu0
    %v1581 = vpop.f32.mrf.mxu0
    %1582 = vdwg.mxu0
    %v1583 = vpack.c.bf16 %v1578, %v1532
    %s1584 = scalar_lea.vmem [#allocation8], 64
    %v1585 = vld [vmem:[%s1584] sm:$0xf]
    %v1586 = vld [vmem:[%s1584 + $0x4] sm:$0xf]
    %v1587 = vld [vmem:[%s1584 + $0x8] sm:$0xf]
    %v1588 = vld [vmem:[%s1584 + $0xc] sm:$0xf]
    %v1589 = vld [vmem:[%s1584 + $0x10] sm:$0xf]
    %v1590 = vld [vmem:[%s1584 + $0x14] sm:$0xf]
    %v1591 = vld [vmem:[%s1584 + $0x18] sm:$0xf]
    %v1592 = vld [vmem:[%s1584 + $0x1c] sm:$0xf]
    %v1593 = vld [vmem:[%s1584 + $0x20] sm:$0xf]
    %v1594 = vld [vmem:[%s1584 + $0x24] sm:$0xf]
    %v1595 = vld [vmem:[%s1584 + $0x28] sm:$0xf]
    %v1596 = vld [vmem:[%s1584 + $0x2c] sm:$0xf]
    %v1597 = vld [vmem:[%s1584 + $0x30] sm:$0xf]
    %v1598 = vld [vmem:[%s1584 + $0x34] sm:$0xf]
    %v1599 = vld [vmem:[%s1584 + $0x38] sm:$0xf]
    %v1600 = vld [vmem:[%s1584 + $0x3c] sm:$0xf]
    %v1601 = vld [vmem:[%s11 + $0x1] sm:$0x1]
    %v1602 = vlaneseq
    %v1603 = vshrl.u32 %v1602, 7
    %v1604 = vsub.s32 0, %v1603
    %v1605 = vrot.slane %v1601, %v1604
    %v1622 = vunpack.c.l.b16 %v1585
    %v1623 = vunpack.c.l.b16 %v1586
    %v1624 = vunpack.c.l.b16 %v1587
    %v1625 = vunpack.c.l.b16 %v1588
    %v1626 = vunpack.c.l.b16 %v1589
    %v1627 = vunpack.c.l.b16 %v1590
    %v1628 = vunpack.c.l.b16 %v1591
    %v1629 = vunpack.c.l.b16 %v1592
    %v1630 = vunpack.c.l.b16 %v1593
    %v1631 = vunpack.c.l.b16 %v1594
    %v1632 = vunpack.c.l.b16 %v1595
    %v1633 = vunpack.c.l.b16 %v1596
    %v1634 = vunpack.c.l.b16 %v1597
    %v1635 = vunpack.c.l.b16 %v1598
    %v1636 = vunpack.c.l.b16 %v1599
    %v1637 = vunpack.c.l.b16 %v1600
    %v1638 = vpack.c.b16 %v1623, %v1622
    %v1639 = vpack.c.b16 %v1625, %v1624
    %v1640 = vpack.c.b16 %v1627, %v1626
    %v1641 = vpack.c.b16 %v1629, %v1628
    %v1642 = vpack.c.b16 %v1631, %v1630
    %v1643 = vpack.c.b16 %v1633, %v1632
    %v1644 = vpack.c.b16 %v1635, %v1634
    %v1645 = vpack.c.b16 %v1637, %v1636
    %1654 = vmatprep.subr.bf16.mxu0 0
    %1655 = vmatpush1.bf16.msra.mxu0 %v1645
    %1656 = vmatprep.subr.bf16.mxu0 0
    %1657 = vmatpush1.bf16.msra.mxu0 %v1644
    %1658 = vmatprep.subr.bf16.mxu0 0
    %1659 = vmatpush1.bf16.msra.mxu0 %v1643
    %1660 = vmatprep.subr.bf16.mxu0 0
    %1661 = vmatpush1.bf16.msra.mxu0 %v1642
    %1662 = vmatprep.subr.bf16.mxu0 0
    %1663 = vmatpush1.bf16.msra.mxu0 %v1641
    %1664 = vmatprep.subr.bf16.mxu0 0
    %1665 = vmatpush1.bf16.msra.mxu0 %v1640
    %1666 = vmatprep.subr.bf16.mxu0 0
    %1667 = vmatpush1.bf16.msra.mxu0 %v1639
    %1668 = vmatprep.subr.bf16.mxu0 0
    %1669 = vmatpush1.bf16.msra.mxu0 %v1638
    %1670 = vmatprep.subr.bf16.mxu0 0
    %1671 = vmatpush2.bf16.msra.mxu0 0
    %1672 = vmatprep.subr.bf16.mxu0 0
    %1673 = vmatpush2.bf16.msra.mxu0 0
    %1674 = vmatprep.subr.bf16.mxu0 0
    %1675 = vmatpush2.bf16.msra.mxu0 0
    %1676 = vmatprep.subr.bf16.mxu0 0
    %1677 = vmatpush2.bf16.msra.mxu0 0
    %1678 = vmatprep.subr.bf16.mxu0 0
    %1679 = vmatpush2.bf16.msra.mxu0 0
    %1680 = vmatprep.subr.bf16.mxu0 0
    %1681 = vmatpush2.bf16.msra.mxu0 0
    %1682 = vmatprep.subr.bf16.mxu0 0
    %1683 = vmatpush2.bf16.msra.mxu0 0
    %1684 = vmatprep.subr.bf16.mxu0 0
    %1685 = vmatpush2.bf16.msra.mxu0 0
    %1686 = vmatprep.mubr.bf16.mxu0 0
    %1687 = vmatmul.mubr.bf16.gmra.mxu0 %v1583
    %v1688 = vpop.f32.mrf.mxu0
    %v1689 = vadd.f32 %v1605, %v1688
    %v1690 = vpop.f32.mrf.mxu0
    %v1691 = vpop.f32.mrf.mxu0
    %v1692 = vadd.f32 %v1605, %v1691
    %v1693 = vpop.f32.mrf.mxu0
    %1694 = vdwg.mxu0
    %v1695 = vadd.f32 %v1111, %v1689
    %v1696 = vadd.f32 %v1112, %v1692
    %v1697 = vld [vmem:[%s12 + $0x1] sm:$0x1]
    %v1698 = vld [vmem:[%s13 + $0x1] sm:$0x1]
    %1699 = vadd.xlane.f32.xlu0 %v1695
    %v1700 = vpop.xlane.xlu0 %1699
    %1701 = vadd.xlane.f32.xlu0 %v1696
    %v1702 = vpop.xlane.xlu0 %1701
    %v1703 = vmul.f32 %v1700, 0.03125
    %v1704 = vmul.f32 %v1702, 0.03125
    %v1705 = vmul.f32 %v1695, %v1695
    %v1706 = vmul.f32 %v1696, %v1696
    %1707 = vadd.xlane.f32.xlu0 %v1705
    %v1708 = vpop.xlane.xlu0 %1707
    %1709 = vadd.xlane.f32.xlu0 %v1706
    %v1710 = vpop.xlane.xlu0 %1709
    %v1711 = vmul.f32 %v1708, 0.03125
    %v1712 = vmul.f32 %v1710, 0.03125
    %v1713 = vmul.f32 %v1703, %v1703
    %v1714 = vmul.f32 %v1704, %v1704
    %v1715 = vsub.f32 %v1711, %v1713
    %v1716 = vsub.f32 %v1712, %v1714
    %v1717 = vmax.f32 %v1715, 0.0
    %v1718 = vmax.f32 %v1716, 0.0
    %v1719 = vsub.f32 %v1695, %v1703
    %v1720 = vsub.f32 %v1696, %v1704
    %v1721 = vadd.f32 %v1717, 1e-08
    %v1722 = vadd.f32 %v1718, 1e-08
    %v1723 = vrsqrt.pop %v1721
    %v1724 = vrsqrt.pop %v1722
    %v1725 = vmul.f32 %v1719, %v1723
    %v1726 = vmul.f32 %v1720, %v1724
    %v1727 = vlaneseq
    %v1728 = vshrl.u32 %v1727, 7
    %v1729 = vsub.s32 0, %v1728
    %v1730 = vrot.slane %v1697, %v1729
    %v1731 = vmul.f32 %v1725, %v1730
    %v1732 = vmul.f32 %v1726, %v1730
    %v1733 = vlaneseq
    %v1734 = vshrl.u32 %v1733, 7
    %v1735 = vsub.s32 0, %v1734
    %v1736 = vrot.slane %v1698, %v1735
    %v1737 = vadd.f32 %v1731, %v1736
    %v1738 = vadd.f32 %v1732, %v1736
    %v1739 = vpack.c.bf16 %v1738, %v1737
    %s1740 = scalar_lea.vmem [#allocation10], 64
    %v1741 = vld [vmem:[%s1740] sm:$0xf]
    %v1742 = vld [vmem:[%s1740 + $0x4] sm:$0xf]
    %v1743 = vld [vmem:[%s1740 + $0x8] sm:$0xf]
    %v1744 = vld [vmem:[%s1740 + $0xc] sm:$0xf]
    %v1745 = vld [vmem:[%s1740 + $0x10] sm:$0xf]
    %v1746 = vld [vmem:[%s1740 + $0x14] sm:$0xf]
    %v1747 = vld [vmem:[%s1740 + $0x18] sm:$0xf]
    %v1748 = vld [vmem:[%s1740 + $0x1c] sm:$0xf]
    %v1749 = vld [vmem:[%s1740 + $0x20] sm:$0xf]
    %v1750 = vld [vmem:[%s1740 + $0x24] sm:$0xf]
    %v1751 = vld [vmem:[%s1740 + $0x28] sm:$0xf]
    %v1752 = vld [vmem:[%s1740 + $0x2c] sm:$0xf]
    %v1753 = vld [vmem:[%s1740 + $0x30] sm:$0xf]
    %v1754 = vld [vmem:[%s1740 + $0x34] sm:$0xf]
    %v1755 = vld [vmem:[%s1740 + $0x38] sm:$0xf]
    %v1756 = vld [vmem:[%s1740 + $0x3c] sm:$0xf]
    %v1757 = vld [vmem:[%s15 + $0x1] sm:$0x1]
    %v1758 = vlaneseq
    %v1759 = vshrl.u32 %v1758, 7
    %v1760 = vsub.s32 0, %v1759
    %v1761 = vrot.slane %v1757, %v1760
    %v1778 = vunpack.c.l.b16 %v1741
    %v1779 = vunpack.c.l.b16 %v1742
    %v1780 = vunpack.c.l.b16 %v1743
    %v1781 = vunpack.c.l.b16 %v1744
    %v1782 = vunpack.c.l.b16 %v1745
    %v1783 = vunpack.c.l.b16 %v1746
    %v1784 = vunpack.c.l.b16 %v1747
    %v1785 = vunpack.c.l.b16 %v1748
    %v1786 = vunpack.c.l.b16 %v1749
    %v1787 = vunpack.c.l.b16 %v1750
    %v1788 = vunpack.c.l.b16 %v1751
    %v1789 = vunpack.c.l.b16 %v1752
    %v1790 = vunpack.c.l.b16 %v1753
    %v1791 = vunpack.c.l.b16 %v1754
    %v1792 = vunpack.c.l.b16 %v1755
    %v1793 = vunpack.c.l.b16 %v1756
    %v1794 = vpack.c.b16 %v1779, %v1778
    %v1795 = vpack.c.b16 %v1781, %v1780
    %v1796 = vpack.c.b16 %v1783, %v1782
    %v1797 = vpack.c.b16 %v1785, %v1784
    %v1798 = vpack.c.b16 %v1787, %v1786
    %v1799 = vpack.c.b16 %v1789, %v1788
    %v1800 = vpack.c.b16 %v1791, %v1790
    %v1801 = vpack.c.b16 %v1793, %v1792
    %1810 = vmatprep.subr.bf16.mxu0 0
    %1811 = vmatpush1.bf16.msra.mxu0 %v1801
    %1812 = vmatprep.subr.bf16.mxu0 0
    %1813 = vmatpush1.bf16.msra.mxu0 %v1800
    %1814 = vmatprep.subr.bf16.mxu0 0
    %1815 = vmatpush1.bf16.msra.mxu0 %v1799
    %1816 = vmatprep.subr.bf16.mxu0 0
    %1817 = vmatpush1.bf16.msra.mxu0 %v1798
    %1818 = vmatprep.subr.bf16.mxu0 0
    %1819 = vmatpush1.bf16.msra.mxu0 %v1797
    %1820 = vmatprep.subr.bf16.mxu0 0
    %1821 = vmatpush1.bf16.msra.mxu0 %v1796
    %1822 = vmatprep.subr.bf16.mxu0 0
    %1823 = vmatpush1.bf16.msra.mxu0 %v1795
    %1824 = vmatprep.subr.bf16.mxu0 0
    %1825 = vmatpush1.bf16.msra.mxu0 %v1794
    %1826 = vmatprep.subr.bf16.mxu0 0
    %1827 = vmatpush2.bf16.msra.mxu0 0
    %1828 = vmatprep.subr.bf16.mxu0 0
    %1829 = vmatpush2.bf16.msra.mxu0 0
    %1830 = vmatprep.subr.bf16.mxu0 0
    %1831 = vmatpush2.bf16.msra.mxu0 0
    %1832 = vmatprep.subr.bf16.mxu0 0
    %1833 = vmatpush2.bf16.msra.mxu0 0
    %1834 = vmatprep.subr.bf16.mxu0 0
    %1835 = vmatpush2.bf16.msra.mxu0 0
    %1836 = vmatprep.subr.bf16.mxu0 0
    %1837 = vmatpush2.bf16.msra.mxu0 0
    %1838 = vmatprep.subr.bf16.mxu0 0
    %1839 = vmatpush2.bf16.msra.mxu0 0
    %1840 = vmatprep.subr.bf16.mxu0 0
    %1841 = vmatpush2.bf16.msra.mxu0 0
    %1842 = vmatprep.mubr.bf16.mxu0 0
    %1843 = vmatmul.mubr.bf16.gmra.mxu0 %v1739
    %v1844 = vpop.f32.mrf.mxu0
    %v1845 = vadd.f32 %v1761, %v1844
    %v1846 = vpop.f32.mrf.mxu0
    %v1847 = vpop.f32.mrf.mxu0
    %v1848 = vadd.f32 %v1761, %v1847
    %v1849 = vpop.f32.mrf.mxu0
    %1850 = vdwg.mxu0
    %v1851 = vmax.f32 %v1845, 0.0
    %v1852 = vmax.f32 %v1848, 0.0
    %v1853 = vpack.c.bf16 %v1852, %v1851
    %s1854 = scalar_lea.vmem [#allocation11], 64
    %v1855 = vld [vmem:[%s1854] sm:$0xf]
    %v1856 = vld [vmem:[%s1854 + $0x4] sm:$0xf]
    %v1857 = vld [vmem:[%s1854 + $0x8] sm:$0xf]
    %v1858 = vld [vmem:[%s1854 + $0xc] sm:$0xf]
    %v1859 = vld [vmem:[%s1854 + $0x10] sm:$0xf]
    %v1860 = vld [vmem:[%s1854 + $0x14] sm:$0xf]
    %v1861 = vld [vmem:[%s1854 + $0x18] sm:$0xf]
    %v1862 = vld [vmem:[%s1854 + $0x1c] sm:$0xf]
    %v1863 = vld [vmem:[%s1854 + $0x20] sm:$0xf]
    %v1864 = vld [vmem:[%s1854 + $0x24] sm:$0xf]
    %v1865 = vld [vmem:[%s1854 + $0x28] sm:$0xf]
    %v1866 = vld [vmem:[%s1854 + $0x2c] sm:$0xf]
    %v1867 = vld [vmem:[%s1854 + $0x30] sm:$0xf]
    %v1868 = vld [vmem:[%s1854 + $0x34] sm:$0xf]
    %v1869 = vld [vmem:[%s1854 + $0x38] sm:$0xf]
    %v1870 = vld [vmem:[%s1854 + $0x3c] sm:$0xf]
    %v1871 = vld [vmem:[%s17 + $0x1] sm:$0x1]
    %v1872 = vlaneseq
    %v1873 = vshrl.u32 %v1872, 7
    %v1874 = vsub.s32 0, %v1873
    %v1875 = vrot.slane %v1871, %v1874
    %v1892 = vunpack.c.l.b16 %v1855
    %v1893 = vunpack.c.l.b16 %v1856
    %v1894 = vunpack.c.l.b16 %v1857
    %v1895 = vunpack.c.l.b16 %v1858
    %v1896 = vunpack.c.l.b16 %v1859
    %v1897 = vunpack.c.l.b16 %v1860
    %v1898 = vunpack.c.l.b16 %v1861
    %v1899 = vunpack.c.l.b16 %v1862
    %v1900 = vunpack.c.l.b16 %v1863
    %v1901 = vunpack.c.l.b16 %v1864
    %v1902 = vunpack.c.l.b16 %v1865
    %v1903 = vunpack.c.l.b16 %v1866
    %v1904 = vunpack.c.l.b16 %v1867
    %v1905 = vunpack.c.l.b16 %v1868
    %v1906 = vunpack.c.l.b16 %v1869
    %v1907 = vunpack.c.l.b16 %v1870
    %v1908 = vpack.c.b16 %v1893, %v1892
    %v1909 = vpack.c.b16 %v1895, %v1894
    %v1910 = vpack.c.b16 %v1897, %v1896
    %v1911 = vpack.c.b16 %v1899, %v1898
    %v1912 = vpack.c.b16 %v1901, %v1900
    %v1913 = vpack.c.b16 %v1903, %v1902
    %v1914 = vpack.c.b16 %v1905, %v1904
    %v1915 = vpack.c.b16 %v1907, %v1906
    %1924 = vmatprep.subr.bf16.mxu0 0
    %1925 = vmatpush1.bf16.msra.mxu0 %v1915
    %1926 = vmatprep.subr.bf16.mxu0 0
    %1927 = vmatpush1.bf16.msra.mxu0 %v1914
    %1928 = vmatprep.subr.bf16.mxu0 0
    %1929 = vmatpush1.bf16.msra.mxu0 %v1913
    %1930 = vmatprep.subr.bf16.mxu0 0
    %1931 = vmatpush1.bf16.msra.mxu0 %v1912
    %1932 = vmatprep.subr.bf16.mxu0 0
    %1933 = vmatpush1.bf16.msra.mxu0 %v1911
    %1934 = vmatprep.subr.bf16.mxu0 0
    %1935 = vmatpush1.bf16.msra.mxu0 %v1910
    %1936 = vmatprep.subr.bf16.mxu0 0
    %1937 = vmatpush1.bf16.msra.mxu0 %v1909
    %1938 = vmatprep.subr.bf16.mxu0 0
    %1939 = vmatpush1.bf16.msra.mxu0 %v1908
    %1940 = vmatprep.subr.bf16.mxu0 0
    %1941 = vmatpush2.bf16.msra.mxu0 0
    %1942 = vmatprep.subr.bf16.mxu0 0
    %1943 = vmatpush2.bf16.msra.mxu0 0
    %1944 = vmatprep.subr.bf16.mxu0 0
    %1945 = vmatpush2.bf16.msra.mxu0 0
    %1946 = vmatprep.subr.bf16.mxu0 0
    %1947 = vmatpush2.bf16.msra.mxu0 0
    %1948 = vmatprep.subr.bf16.mxu0 0
    %1949 = vmatpush2.bf16.msra.mxu0 0
    %1950 = vmatprep.subr.bf16.mxu0 0
    %1951 = vmatpush2.bf16.msra.mxu0 0
    %1952 = vmatprep.subr.bf16.mxu0 0
    %1953 = vmatpush2.bf16.msra.mxu0 0
    %1954 = vmatprep.subr.bf16.mxu0 0
    %1955 = vmatpush2.bf16.msra.mxu0 0
    %1956 = vmatprep.mubr.bf16.mxu0 0
    %1957 = vmatmul.mubr.bf16.gmra.mxu0 %v1853
    %v1958 = vpop.f32.mrf.mxu0
    %v1959 = vadd.f32 %v1875, %v1958
    %v1960 = vpop.f32.mrf.mxu0
    %v1961 = vpop.f32.mrf.mxu0
    %v1962 = vadd.f32 %v1875, %v1961
    %v1963 = vpop.f32.mrf.mxu0
    %1964 = vdwg.mxu0
    %v1965 = vadd.f32 %v1959, %v1737
    %v1966 = vadd.f32 %v1962, %v1738
    %v1967 = vmul.f32 %v1965, %v161
    %v1968 = vmul.f32 %v1966, %v166
    %v1969 = vld [vmem:[%s18] sm:$0x1]
    %v1970 = vld [vmem:[%s19] sm:$0x1]
    %1971 = vadd.xlane.f32.xlu0 %v1967
    %v1972 = vpop.xlane.xlu0 %1971
    %1973 = vadd.xlane.f32.xlu0 %v1968
    %v1974 = vpop.xlane.xlu0 %1973
    %v1975 = vmul.f32 %v1972, 0.03125
    %v1976 = vmul.f32 %v1974, 0.03125
    %v1977 = vmul.f32 %v1967, %v1967
    %v1978 = vmul.f32 %v1968, %v1968
    %1979 = vadd.xlane.f32.xlu0 %v1977
    %v1980 = vpop.xlane.xlu0 %1979
    %1981 = vadd.xlane.f32.xlu0 %v1978
    %v1982 = vpop.xlane.xlu0 %1981
    %v1983 = vmul.f32 %v1980, 0.03125
    %v1984 = vmul.f32 %v1982, 0.03125
    %v1985 = vmul.f32 %v1975, %v1975
    %v1986 = vmul.f32 %v1976, %v1976
    %v1987 = vsub.f32 %v1983, %v1985
    %v1988 = vsub.f32 %v1984, %v1986
    %v1989 = vmax.f32 %v1987, 0.0
    %v1990 = vmax.f32 %v1988, 0.0
    %v1991 = vsub.f32 %v1967, %v1975
    %v1992 = vsub.f32 %v1968, %v1976
    %v1993 = vadd.f32 %v1989, 1e-08
    %v1994 = vadd.f32 %v1990, 1e-08
    %v1995 = vrsqrt.pop %v1993
    %v1996 = vrsqrt.pop %v1994
    %v1997 = vmul.f32 %v1991, %v1995
    %v1998 = vmul.f32 %v1992, %v1996
    %v2000 = vlaneseq
    %v2001 = vshrl.u32 %v2000, 7
    %v2002 = vsub.s32 0, %v2001
    %v2003 = vrot.slane %v1969, %v2002
    %v2005 = vmul.f32 %v1997, %v2003
    %v2006 = vmul.f32 %v1998, %v2003
    %v2008 = vlaneseq
    %v2009 = vshrl.u32 %v2008, 7
    %v2010 = vsub.s32 0, %v2009
    %v2011 = vrot.slane %v1970, %v2010
    %v2013 = vadd.f32 %v2005, %v2011
    %v2014 = vadd.f32 %v2006, %v2011
    %v2015 = vld [vmem:[%s2] sm:$0xf]
    %v2016 = vld [vmem:[%s2 + $0x4] sm:$0xf]
    %v2017 = vunpack.c.l.bf16 %v2015
    %v2018 = vunpack.c.l.bf16 %v2016
    %v2019 = vmul.f32 %v2013, %v2017
    %v2020 = vmul.f32 %v2014, %v2018
    %2021 = vadd.xlane.f32.xlu0 %v2019
    %v2022 = vpop.xlane.xlu0 %2021
    %2023 = vadd.xlane.f32.xlu0 %v2020
    %v2024 = vpop.xlane.xlu0 %2023
    %v2027 = vlaneseq
    %v2028 = vshrl.u32 %v2027, 7
    %v2029 = vsub.s32 %v173, %v2028
    %v2030 = vrot.slane %v2022, %v2029
    %v2031 = vlaneseq
    %v2032 = vshrl.u32 %v2031, 7
    %v2033 = vsub.s32 %v173, %v2032
    %v2034 = vrot.slane %v2024, %v2033
    %vm2035 = vcmask 1041409
    %v2036 = vsel %vm2035, %v2034, %v2030
    %vm2038 = vcmask 58368
    %2039 = vst.msk [vmem:[#allocation13] sm:$0x3] %vm2038, %v2036
    %v2040 = vld [vmem:[#allocation2] sm:$0xf]
    %v2041 = vld [vmem:[#allocation2 + $0x4] sm:$0xf]
    %v2042 = vunpack.c.l.bf16 %v2040
    %v2043 = vunpack.c.l.bf16 %v2041
    %v2044 = vmul.f32 %v2013, %v2042
    %v2045 = vmul.f32 %v2014, %v2043
    %2046 = vadd.xlane.f32.xlu0 %v2044
    %v2047 = vpop.xlane.xlu0 %2046
    %2048 = vadd.xlane.f32.xlu0 %v2045
    %v2049 = vpop.xlane.xlu0 %2048
    %v2052 = vlaneseq
    %v2053 = vshrl.u32 %v2052, 7
    %v2054 = vsub.s32 %v173, %v2053
    %v2055 = vrot.slane %v2047, %v2054
    %v2056 = vlaneseq
    %v2057 = vshrl.u32 %v2056, 7
    %v2058 = vsub.s32 %v173, %v2057
    %v2059 = vrot.slane %v2049, %v2058
    %v2060 = vsel %vm2035, %v2059, %v2055
    %2062 = vst.msk [vmem:[#allocation14] sm:$0x3] %vm2038, %v2060
    // Predicated region
    $region106: #{tpu_custom_call.1} parent=1 // pred_check
      _
    $region107: #{tpu_custom_call.1} parent=1 // pred_check_branch
      %2064 = sbr.rel (0) target = $region109
    $region108: #{tpu_custom_call.1} parent=1 // pred_region
      %s2066 = ssub.s32 32, 32
      %2067 = vsyncadd [#allocation4], %s2066
      %s2069 = sshll.u32 [#allocation13], 4
      %s2070 = int_to_ptr.vmem [resolvable:$true] %s2069
      %2072 = dma.vmem_to_hbm [thread:$0]  %s2070, 32, %s20, [#allocation4]
    $region109: #{tpu_custom_call.1} parent=1 // pred_fallthru
      _
    // Predicated region
    $region110: #{tpu_custom_call.1} parent=1 // pred_check
      _
    $region111: #{tpu_custom_call.1} parent=1 // pred_check_branch
      %2074 = sbr.rel (0) target = $region113
    $region112: #{tpu_custom_call.1} parent=1 // pred_region
      %s2076 = ssub.s32 32, 32
      %2077 = vsyncadd [#allocation15], %s2076
      %s2079 = sshll.u32 [#allocation14], 4
      %s2080 = int_to_ptr.vmem [resolvable:$true] %s2079
      %2082 = dma.vmem_to_hbm [thread:$0]  %s2080, 32, %s21, [#allocation15]
    $region113: #{tpu_custom_call.1} parent=1 // pred_fallthru
      _
    // Predicated region
    $region114: #{tpu_custom_call.1} parent=1 // pred_check
      _
    $region115: #{tpu_custom_call.1} parent=1 // pred_check_branch
      %2084 = sbr.rel (0) target = $region117
    $region116: #{tpu_custom_call.1} parent=1 // pred_region
      %2085 = dma.done [#allocation4], 32
    $region117: #{tpu_custom_call.1} parent=1 // pred_fallthru
      _
    // Predicated region
    $region118: #{tpu_custom_call.1} parent=1 // pred_check
      _
    $region119: #{tpu_custom_call.1} parent=1 // pred_check_branch
      %2087 = sbr.rel (0) target = $region121
    $region120: #{tpu_custom_call.1} parent=1 // pred_region
      %2088 = dma.done [#allocation15], 32
    $region121: #{tpu_custom_call.1} parent=1 // pred_fallthru
      _
    %2089 = vsyncpa [#allocation3], 1
    %2090 = vsyncpa [#allocation6], 1
    %2091 = vsyncpa [#allocation9], 1
    %2092 = vsyncpa [#allocation12], 1
    %2093 = vsyncpa [#allocation4], 1
    %2094 = vsyncpa [#allocation15], 1

</llo_original>
